<compile_context>
chip_gen: v6e
topology: v6e:2x2x1
jax: 0.10.0
libtpu: 0.0.40
codegen_flags: <defaults>
</compile_context>

<pallas_src>
import functools

import jax
import jax.numpy as jnp
from jax.experimental import pallas as pl
from jax.experimental.pallas import tpu as pltpu

GATE_PAD = 128  # each LSTM gate occupies its own 128-lane block (requires H <= 128)


def _rnn_gate_kernel(xs_ref, h_ref, c_ref, wih_ref, whh_ref, b_ref, pw_ref, pb_ref,
                     prob_ref, h_out_ref, c_out_ref, hs_ref):
    T = xs_ref.shape[0]
    GP = h_ref.shape[1]

    # Weights loaded once; they stay in VMEM/vregs for all T steps.
    wih = wih_ref[...]                       # (D,  4*GP) bf16, gate-aligned columns
    whh = whh_ref[...]                       # (GP, 4*GP) bf16, rows [H:GP) are zero
    b = b_ref[...]                           # (1,  4*GP) f32,  gate-aligned

    def step(t, carry):
        h, c = carry                         # (B, GP) f32, valid lanes [0:H)
        x = xs_ref[t]                        # (B, D)  f32
        gates = (jnp.dot(x.astype(jnp.bfloat16), wih,
                         preferred_element_type=jnp.float32)
                 + jnp.dot(h.astype(jnp.bfloat16), whh,
                           preferred_element_type=jnp.float32)
                 + b)                        # (B, 4*GP) f32; gate g in lanes [g*GP, g*GP+H)
        i_g = jax.nn.sigmoid(gates[:, 0 * GP:1 * GP])
        f_g = jax.nn.sigmoid(gates[:, 1 * GP:2 * GP])
        g_g = jnp.tanh(gates[:, 2 * GP:3 * GP])
        o_g = jax.nn.sigmoid(gates[:, 3 * GP:4 * GP])
        c_new = f_g * c + i_g * g_g          # padded lanes stay exactly 0
        h_new = o_g * jnp.tanh(c_new)
        hs_ref[t] = h_new                    # stash per-step h for the batched projection
        return (h_new, c_new)

    h_fin, c_fin = jax.lax.fori_loop(0, T, step, (h_ref[...], c_ref[...]),
                                     unroll=(T <= 32))

    # 1x1 conv (H -> 1) for all steps at once: VPU multiply + XLU lane reduction.
    # pw has zeros in padded lanes, so the reduction ignores them automatically.
    proj = jnp.sum(hs_ref[...] * pw_ref[...], axis=-1) + pb_ref[0, 0]   # (T, B)
    prob_ref[...] = jax.nn.sigmoid(proj)
    h_out_ref[...] = h_fin
    c_out_ref[...] = c_fin


def prepare_params(params, gate_pad=GATE_PAD):
    """One-time parameter prep (hoisted entirely out of the per-step path)."""
    w_ih = jnp.asarray(params["w_ih"], jnp.float32)      # (4H, D)  as in nn.LSTM
    w_hh = jnp.asarray(params["w_hh"], jnp.float32)      # (4H, H)
    H = w_hh.shape[1]
    D = w_ih.shape[1]
    GP = gate_pad
    assert H <= GP, "hidden_dim > 128 needs a larger gate_pad"

    bias = (jnp.asarray(params["b_ih"], jnp.float32)
            + jnp.asarray(params["b_hh"], jnp.float32))  # (4H,)
    wih_t = w_ih.T                                       # (D, 4H)  gates i,f,g,o
    whh_t = w_hh.T                                       # (H, 4H)

    # Scatter each gate into its own 128-lane block; padding lanes get zero
    # weight & bias -> sigmoid(0)/tanh(0) there, and h/c padding stays exactly 0.
    wih_p = jnp.zeros((D, 4 * GP), jnp.float32)
    whh_p = jnp.zeros((GP, 4 * GP), jnp.float32)
    b_p = jnp.zeros((1, 4 * GP), jnp.float32)
    for g in range(4):
        wih_p = wih_p.at[:, g * GP:g * GP + H].set(wih_t[:, g * H:(g + 1) * H])
        whh_p = whh_p.at[:H, g * GP:g * GP + H].set(whh_t[:, g * H:(g + 1) * H])
        b_p = b_p.at[0, g * GP:g * GP + H].set(bias[g * H:(g + 1) * H])

    pw_p = jnp.zeros((1, GP), jnp.float32).at[0, :H].set(
        jnp.asarray(params["proj_w"], jnp.float32).reshape(H))        # conv (1,H,1,1)
    pb = jnp.asarray(params["proj_b"], jnp.float32).reshape(1, 1)

    return {
        "hidden_dim": H, "input_dim": D, "gate_pad": GP,
        "wih": wih_p.astype(jnp.bfloat16),   # (D,  4*GP)
        "whh": whh_p.astype(jnp.bfloat16),   # (GP, 4*GP)
        "b": b_p,                            # (1,  4*GP) f32
        "pw": pw_p,                          # (1,  GP)   f32
        "pb": pb,                            # (1,  1)    f32 (SMEM scalar)
    }


def init_hidden(batch_size, prepared):
    """Recurrent state kept lane-padded (B, GP) end-to-end; valid lanes are [0:H)."""
    GP = prepared["gate_pad"]
    zeros = jnp.zeros((batch_size, GP), jnp.float32)
    return zeros, jnp.zeros_like(zeros)


@functools.partial(jax.jit, donate_argnums=(1, 2))
def _rnn_gate_steps(xs, h, c, wih, whh, b, pw, pb):
    T, B, _ = xs.shape
    GP = h.shape[1]
    vmem = pl.BlockSpec(memory_space=pltpu.MemorySpace.VMEM)
    smem = pl.BlockSpec(memory_space=pltpu.MemorySpace.SMEM)

    prob, h_new, c_new = pl.pallas_call(
        _rnn_gate_kernel,
        out_shape=(
            jax.ShapeDtypeStruct((T, B), jnp.float32),    # prob per step
            jax.ShapeDtypeStruct((B, GP), jnp.float32),   # new h (lane-padded)
            jax.ShapeDtypeStruct((B, GP), jnp.float32),   # new c (lane-padded)
        ),
        in_specs=[vmem, vmem, vmem, vmem, vmem, vmem, vmem, smem],
        out_specs=(vmem, vmem, vmem),
        scratch_shapes=[pltpu.VMEM((T, B, GP), jnp.float32)],   # per-step h stash
        # Recurrent state updated in place (donated by jit -> genuinely aliased).
        input_output_aliases={1: 1, 2: 2},
    )(xs, h, c, wih, whh, b, pw, pb)

    action = (prob > 0.5).astype(jnp.float32)
    return prob, action, h_new, c_new


def rnn_gate_policy_forward_steps(xs, hidden, prepared):
    """Fused gate over T steps. xs: (T, B, input_dim); hidden: (h, c) each (B, GP).

    Returns ((action_reshape (T,B,1,1,1), prob (T,B), action (T,B), dist=None), new_hidden).
    NOTE: `hidden` is donated (in-place update) — do not reuse the passed-in buffers.
    """
    h, c = hidden
    prob, action, h_new, c_new = _rnn_gate_steps(
        xs, h, c, prepared["wih"], prepared["whh"], prepared["b"],
        prepared["pw"], prepared["pb"])
    T, B = prob.shape
    action_reshape = action.reshape(T, B, 1, 1, 1)
    dist = None  # eval mode
    # TODO(synk): training-mode Categorical sampling (torch.distributions) not
    # implemented; only the eval path (threshold at 0.5) is reproduced.
    return (action_reshape, prob, action, dist), (h_new, c_new)


def rnn_gate_policy_forward(x, hidden, prepared):
    """Single-step API matching RNNGatePolicy.forward (eval). x: (B, input_dim)."""
    (ar, prob, action, dist), new_hidden = rnn_gate_policy_forward_steps(
        x[None], hidden, prepared)
    return (ar[0], prob[0], action[0], dist), new_hidden


def init_params(key, input_dim, hidden_dim):
    """Deterministic init matching nn.LSTM / 1x1 Conv2d parameter shapes."""
    ks = jax.random.split(key, 6)
    k_lstm = 1.0 / jnp.sqrt(hidden_dim)
    k_proj = 1.0 / jnp.sqrt(hidden_dim)     # conv fan_in = hidden_dim * 1 * 1
    u = lambda k, shape, b: jax.random.uniform(k, shape, jnp.float32, -b, b)
    return {
        "w_ih": u(ks[0], (4 * hidden_dim, input_dim), k_lstm),
        "w_hh": u(ks[1], (4 * hidden_dim, hidden_dim), k_lstm),
        "b_ih": u(ks[2], (4 * hidden_dim,), k_lstm),
        "b_hh": u(ks[3], (4 * hidden_dim,), k_lstm),
        "proj_w": u(ks[4], (1, hidden_dim, 1, 1), k_proj),
        "proj_b": u(ks[5], (1,), k_proj),
    }


def _reference_steps(xs, params):
    """Pure-JAX f32 reference: iterate the module's forward T times from zero state."""
    T, B, _ = xs.shape
    H = params["w_hh"].shape[1]
    h = jnp.zeros((B, H), jnp.float32)
    c = jnp.zeros((B, H), jnp.float32)
    probs = []
    for t in range(T):
        gates = (xs[t] @ params["w_ih"].T + h @ params["w_hh"].T
                 + params["b_ih"] + params["b_hh"])
        i, f, g, o = (gates[:, 0:H], gates[:, H:2 * H],
                      gates[:, 2 * H:3 * H], gates[:, 3 * H:4 * H])
        c = jax.nn.sigmoid(f) * c + jax.nn.sigmoid(i) * jnp.tanh(g)
        h = jax.nn.sigmoid(o) * jnp.tanh(c)
        proj = h @ params["proj_w"].reshape(1, H).T + params["proj_b"]
        probs.append(jax.nn.sigmoid(proj).reshape(B))
    return jnp.stack(probs), h, c


if __name__ == "__main__":
    T, B, input_dim, hidden_dim = 8, 2, 16, 32

    key = jax.random.PRNGKey(0)
    k_x, k_p = jax.random.split(key)
    xs = jax.random.normal(k_x, (T, B, input_dim), dtype=jnp.float32)
    params = init_params(k_p, input_dim, hidden_dim)
    prepared = prepare_params(params)            # hoisted out of the per-call path
    hidden = init_hidden(B, prepared)            # zeros, (B, 128) lane-padded

    # Fused multi-step gate (one pallas_call for all T SkipNet-block invocations).
    (action_reshape, prob, action, dist), new_hidden = rnn_gate_policy_forward_steps(
        xs, hidden, prepared)
    jax.block_until_ready((action_reshape, prob, action, new_hidden))

    # Sanity check against a pure-JAX f32 reference (bf16 matmul -> loosened tol).
    prob_ref, h_ref, c_ref = _reference_steps(xs, params)
    H = hidden_dim
    assert jnp.allclose(prob, prob_ref, atol=3e-2), (prob, prob_ref)
    assert jnp.allclose(new_hidden[0][:, :H], h_ref, atol=3e-2)
    assert jnp.allclose(new_hidden[1][:, :H], c_ref, atol=3e-2)
    # padding lanes of the recurrent state must remain exactly zero
    assert jnp.all(new_hidden[0][:, H:] == 0.0) and jnp.all(new_hidden[1][:, H:] == 0.0)
    # actions agree except where the reference prob is borderline (bf16 rounding)
    action_ref = (prob_ref > 0.5).astype(jnp.float32)
    assert jnp.all((action == action_ref) | (jnp.abs(prob_ref - 0.5) < 0.05))
    assert action_reshape.shape == (T, B, 1, 1, 1)
    assert prob.shape == (T, B)

    # Single-step API (module-equivalent forward, T == 1 of the same kernel).
    hidden1 = init_hidden(B, prepared)
    (ar1, prob1, act1, _), hidden1 = rnn_gate_policy_forward(xs[0], hidden1, prepared)
    jax.block_until_ready((ar1, prob1, act1, hidden1))
    assert ar1.shape == (B, 1, 1, 1) and prob1.shape == (B,) and act1.shape == (B,)
    assert jnp.allclose(prob1, prob_ref[0], atol=3e-2)

    print("KERNEL_OK")
</pallas_src>

<mosaic_0001>
module attributes {stable_mosaic.version = 11 : i64} {
  func.func @_rnn_gate_kernel(%arg0: memref<8x2x16xf32, #tpu.memory_space<vmem>>, %arg1: memref<2x128xf32, #tpu.memory_space<vmem>>, %arg2: memref<2x128xf32, #tpu.memory_space<vmem>>, %arg3: memref<16x512xbf16, #tpu.memory_space<vmem>>, %arg4: memref<128x512xbf16, #tpu.memory_space<vmem>>, %arg5: memref<1x512xf32, #tpu.memory_space<vmem>>, %arg6: memref<1x128xf32, #tpu.memory_space<vmem>>, %arg7: memref<1x1xf32, #tpu.memory_space<smem>>, %arg8: memref<8x2xf32, #tpu.memory_space<vmem>>, %arg9: memref<2x128xf32, #tpu.memory_space<vmem>>, %arg10: memref<2x128xf32, #tpu.memory_space<vmem>>, %arg11: memref<8x2x128xf32, #tpu.memory_space<vmem>>) attributes {dimension_semantics = [], scalar_prefetch = 0 : i64, scratch_operands = 1 : i64, tpu.core_type = #tpu.core_type<tc>} {
    %c0 = arith.constant 0 : index
    %c0_0 = arith.constant 0 : index
    %0 = vector.load %arg3[%c0, %c0_0] : memref<16x512xbf16, #tpu.memory_space<vmem>>, vector<16x512xbf16>
    %c0_1 = arith.constant 0 : index
    %c0_2 = arith.constant 0 : index
    %1 = vector.load %arg4[%c0_1, %c0_2] : memref<128x512xbf16, #tpu.memory_space<vmem>>, vector<128x512xbf16>
    %c0_3 = arith.constant 0 : index
    %c0_4 = arith.constant 0 : index
    %2 = vector.load %arg5[%c0_3, %c0_4] : memref<1x512xf32, #tpu.memory_space<vmem>>, vector<1x512xf32>
    %c0_5 = arith.constant 0 : index
    %c0_6 = arith.constant 0 : index
    %3 = vector.load %arg1[%c0_5, %c0_6] : memref<2x128xf32, #tpu.memory_space<vmem>>, vector<2x128xf32>
    %c0_7 = arith.constant 0 : index
    %c0_8 = arith.constant 0 : index
    %4 = vector.load %arg2[%c0_7, %c0_8] : memref<2x128xf32, #tpu.memory_space<vmem>>, vector<2x128xf32>
    %c0_i32 = arith.constant 0 : i32
    %5 = arith.index_cast %c0_i32 : i32 to index
    %c0_9 = arith.constant 0 : index
    %c0_10 = arith.constant 0 : index
    %6 = vector.load %arg0[%5, %c0_9, %c0_10] : memref<8x2x16xf32, #tpu.memory_space<vmem>>, vector<1x2x16xf32>
    %7 = vector.shape_cast %6 : vector<1x2x16xf32> to vector<2x16xf32>
    %8 = arith.truncf %7 : vector<2x16xf32> to vector<2x16xbf16>
    %cst = arith.constant dense<0.000000e+00> : vector<2x512xf32>
    %9 = tpu.matmul %8, %0, %cst {dimension_numbers = #tpu.dot_dimension_numbers<[1], [0], [0], [1], [0, 0, 1, 1], [], []>} : vector<2x16xbf16>, vector<16x512xbf16>, vector<2x512xf32> -> vector<2x512xf32>
    %10 = arith.truncf %3 : vector<2x128xf32> to vector<2x128xbf16>
    %cst_11 = arith.constant dense<0.000000e+00> : vector<2x512xf32>
    %11 = tpu.matmul %10, %1, %cst_11 {dimension_numbers = #tpu.dot_dimension_numbers<[1], [0], [0], [1], [0, 0, 1, 1], [], []>} : vector<2x128xbf16>, vector<128x512xbf16>, vector<2x512xf32> -> vector<2x512xf32>
    %12 = arith.addf %9, %11 : vector<2x512xf32>
    %13 = vector.broadcast %2 : vector<1x512xf32> to vector<2x512xf32>
    %14 = arith.addf %12, %13 : vector<2x512xf32>
    %15 = vector.extract_strided_slice %14 {offsets = [0, 0], sizes = [2, 128], strides = [1, 1]} : vector<2x512xf32> to vector<2x128xf32>
    %16 = arith.negf %15 : vector<2x128xf32>
    %17 = math.exp %16 : vector<2x128xf32>
    %cst_12 = arith.constant 1.000000e+00 : f32
    %18 = vector.broadcast %cst_12 : f32 to vector<2x128xf32>
    %19 = arith.addf %18, %17 : vector<2x128xf32>
    %20 = arith.divf %18, %19 : vector<2x128xf32>
    %21 = vector.extract_strided_slice %14 {offsets = [0, 128], sizes = [2, 128], strides = [1, 1]} : vector<2x512xf32> to vector<2x128xf32>
    %22 = arith.negf %21 : vector<2x128xf32>
    %23 = math.exp %22 : vector<2x128xf32>
    %cst_13 = arith.constant 1.000000e+00 : f32
    %24 = vector.broadcast %cst_13 : f32 to vector<2x128xf32>
    %25 = arith.addf %24, %23 : vector<2x128xf32>
    %26 = arith.divf %24, %25 : vector<2x128xf32>
    %27 = vector.extract_strided_slice %14 {offsets = [0, 256], sizes = [2, 128], strides = [1, 1]} : vector<2x512xf32> to vector<2x128xf32>
    %28 = math.tanh %27 : vector<2x128xf32>
    %29 = vector.extract_strided_slice %14 {offsets = [0, 384], sizes = [2, 128], strides = [1, 1]} : vector<2x512xf32> to vector<2x128xf32>
    %30 = arith.negf %29 : vector<2x128xf32>
    %31 = math.exp %30 : vector<2x128xf32>
    %cst_14 = arith.constant 1.000000e+00 : f32
    %32 = vector.broadcast %cst_14 : f32 to vector<2x128xf32>
    %33 = arith.addf %32, %31 : vector<2x128xf32>
    %34 = arith.divf %32, %33 : vector<2x128xf32>
    %35 = arith.mulf %26, %4 : vector<2x128xf32>
    %36 = arith.mulf %20, %28 : vector<2x128xf32>
    %37 = arith.addf %35, %36 : vector<2x128xf32>
    %38 = math.tanh %37 : vector<2x128xf32>
    %39 = arith.mulf %34, %38 : vector<2x128xf32>
    %40 = arith.index_cast %c0_i32 : i32 to index
    %c0_15 = arith.constant 0 : index
    %c0_16 = arith.constant 0 : index
    %41 = vector.load %arg11[%40, %c0_15, %c0_16] : memref<8x2x128xf32, #tpu.memory_space<vmem>>, vector<1x2x128xf32>
    %42 = vector.shape_cast %41 : vector<1x2x128xf32> to vector<2x128xf32>
    %43 = vector.shape_cast %39 : vector<2x128xf32> to vector<1x2x128xf32>
    tpu.vector_store %arg11[%40, %c0_15, %c0_16], %43 {strides = array<i32>} : memref<8x2x128xf32, #tpu.memory_space<vmem>>, vector<1x2x128xf32>,
    %c1_i32 = arith.constant 1 : i32
    %44 = arith.index_cast %c1_i32 : i32 to index
    %c0_17 = arith.constant 0 : index
    %c0_18 = arith.constant 0 : index
    %45 = vector.load %arg0[%44, %c0_17, %c0_18] : memref<8x2x16xf32, #tpu.memory_space<vmem>>, vector<1x2x16xf32>
    %46 = vector.shape_cast %45 : vector<1x2x16xf32> to vector<2x16xf32>
    %47 = arith.truncf %46 : vector<2x16xf32> to vector<2x16xbf16>
    %cst_19 = arith.constant dense<0.000000e+00> : vector<2x512xf32>
    %48 = tpu.matmul %47, %0, %cst_19 {dimension_numbers = #tpu.dot_dimension_numbers<[1], [0], [0], [1], [0, 0, 1, 1], [], []>} : vector<2x16xbf16>, vector<16x512xbf16>, vector<2x512xf32> -> vector<2x512xf32>
    %49 = arith.truncf %39 : vector<2x128xf32> to vector<2x128xbf16>
    %cst_20 = arith.constant dense<0.000000e+00> : vector<2x512xf32>
    %50 = tpu.matmul %49, %1, %cst_20 {dimension_numbers = #tpu.dot_dimension_numbers<[1], [0], [0], [1], [0, 0, 1, 1], [], []>} : vector<2x128xbf16>, vector<128x512xbf16>, vector<2x512xf32> -> vector<2x512xf32>
    %51 = arith.addf %48, %50 : vector<2x512xf32>
    %52 = vector.broadcast %2 : vector<1x512xf32> to vector<2x512xf32>
    %53 = arith.addf %51, %52 : vector<2x512xf32>
    %54 = vector.extract_strided_slice %53 {offsets = [0, 0], sizes = [2, 128], strides = [1, 1]} : vector<2x512xf32> to vector<2x128xf32>
    %55 = arith.negf %54 : vector<2x128xf32>
    %56 = math.exp %55 : vector<2x128xf32>
    %cst_21 = arith.constant 1.000000e+00 : f32
    %57 = vector.broadcast %cst_21 : f32 to vector<2x128xf32>
    %58 = arith.addf %57, %56 : vector<2x128xf32>
    %59 = arith.divf %57, %58 : vector<2x128xf32>
    %60 = vector.extract_strided_slice %53 {offsets = [0, 128], sizes = [2, 128], strides = [1, 1]} : vector<2x512xf32> to vector<2x128xf32>
    %61 = arith.negf %60 : vector<2x128xf32>
    %62 = math.exp %61 : vector<2x128xf32>
    %cst_22 = arith.constant 1.000000e+00 : f32
    %63 = vector.broadcast %cst_22 : f32 to vector<2x128xf32>
    %64 = arith.addf %63, %62 : vector<2x128xf32>
    %65 = arith.divf %63, %64 : vector<2x128xf32>
    %66 = vector.extract_strided_slice %53 {offsets = [0, 256], sizes = [2, 128], strides = [1, 1]} : vector<2x512xf32> to vector<2x128xf32>
    %67 = math.tanh %66 : vector<2x128xf32>
    %68 = vector.extract_strided_slice %53 {offsets = [0, 384], sizes = [2, 128], strides = [1, 1]} : vector<2x512xf32> to vector<2x128xf32>
    %69 = arith.negf %68 : vector<2x128xf32>
    %70 = math.exp %69 : vector<2x128xf32>
    %cst_23 = arith.constant 1.000000e+00 : f32
    %71 = vector.broadcast %cst_23 : f32 to vector<2x128xf32>
    %72 = arith.addf %71, %70 : vector<2x128xf32>
    %73 = arith.divf %71, %72 : vector<2x128xf32>
    %74 = arith.mulf %65, %37 : vector<2x128xf32>
    %75 = arith.mulf %59, %67 : vector<2x128xf32>
    %76 = arith.addf %74, %75 : vector<2x128xf32>
    %77 = math.tanh %76 : vector<2x128xf32>
    %78 = arith.mulf %73, %77 : vector<2x128xf32>
    %79 = arith.index_cast %c1_i32 : i32 to index
    %c0_24 = arith.constant 0 : index
    %c0_25 = arith.constant 0 : index
    %80 = vector.load %arg11[%79, %c0_24, %c0_25] : memref<8x2x128xf32, #tpu.memory_space<vmem>>, vector<1x2x128xf32>
    %81 = vector.shape_cast %80 : vector<1x2x128xf32> to vector<2x128xf32>
    %82 = vector.shape_cast %78 : vector<2x128xf32> to vector<1x2x128xf32>
    tpu.vector_store %arg11[%79, %c0_24, %c0_25], %82 {strides = array<i32>} : memref<8x2x128xf32, #tpu.memory_space<vmem>>, vector<1x2x128xf32>,
    %c2_i32 = arith.constant 2 : i32
    %83 = arith.index_cast %c2_i32 : i32 to index
    %c0_26 = arith.constant 0 : index
    %c0_27 = arith.constant 0 : index
    %84 = vector.load %arg0[%83, %c0_26, %c0_27] : memref<8x2x16xf32, #tpu.memory_space<vmem>>, vector<1x2x16xf32>
    %85 = vector.shape_cast %84 : vector<1x2x16xf32> to vector<2x16xf32>
    %86 = arith.truncf %85 : vector<2x16xf32> to vector<2x16xbf16>
    %cst_28 = arith.constant dense<0.000000e+00> : vector<2x512xf32>
    %87 = tpu.matmul %86, %0, %cst_28 {dimension_numbers = #tpu.dot_dimension_numbers<[1], [0], [0], [1], [0, 0, 1, 1], [], []>} : vector<2x16xbf16>, vector<16x512xbf16>, vector<2x512xf32> -> vector<2x512xf32>
    %88 = arith.truncf %78 : vector<2x128xf32> to vector<2x128xbf16>
    %cst_29 = arith.constant dense<0.000000e+00> : vector<2x512xf32>
    %89 = tpu.matmul %88, %1, %cst_29 {dimension_numbers = #tpu.dot_dimension_numbers<[1], [0], [0], [1], [0, 0, 1, 1], [], []>} : vector<2x128xbf16>, vector<128x512xbf16>, vector<2x512xf32> -> vector<2x512xf32>
    %90 = arith.addf %87, %89 : vector<2x512xf32>
    %91 = vector.broadcast %2 : vector<1x512xf32> to vector<2x512xf32>
    %92 = arith.addf %90, %91 : vector<2x512xf32>
    %93 = vector.extract_strided_slice %92 {offsets = [0, 0], sizes = [2, 128], strides = [1, 1]} : vector<2x512xf32> to vector<2x128xf32>
    %94 = arith.negf %93 : vector<2x128xf32>
    %95 = math.exp %94 : vector<2x128xf32>
    %cst_30 = arith.constant 1.000000e+00 : f32
    %96 = vector.broadcast %cst_30 : f32 to vector<2x128xf32>
    %97 = arith.addf %96, %95 : vector<2x128xf32>
    %98 = arith.divf %96, %97 : vector<2x128xf32>
    %99 = vector.extract_strided_slice %92 {offsets = [0, 128], sizes = [2, 128], strides = [1, 1]} : vector<2x512xf32> to vector<2x128xf32>
    %100 = arith.negf %99 : vector<2x128xf32>
    %101 = math.exp %100 : vector<2x128xf32>
    %cst_31 = arith.constant 1.000000e+00 : f32
    %102 = vector.broadcast %cst_31 : f32 to vector<2x128xf32>
    %103 = arith.addf %102, %101 : vector<2x128xf32>
    %104 = arith.divf %102, %103 : vector<2x128xf32>
    %105 = vector.extract_strided_slice %92 {offsets = [0, 256], sizes = [2, 128], strides = [1, 1]} : vector<2x512xf32> to vector<2x128xf32>
    %106 = math.tanh %105 : vector<2x128xf32>
    %107 = vector.extract_strided_slice %92 {offsets = [0, 384], sizes = [2, 128], strides = [1, 1]} : vector<2x512xf32> to vector<2x128xf32>
    %108 = arith.negf %107 : vector<2x128xf32>
    %109 = math.exp %108 : vector<2x128xf32>
    %cst_32 = arith.constant 1.000000e+00 : f32
    %110 = vector.broadcast %cst_32 : f32 to vector<2x128xf32>
    %111 = arith.addf %110, %109 : vector<2x128xf32>
    %112 = arith.divf %110, %111 : vector<2x128xf32>
    %113 = arith.mulf %104, %76 : vector<2x128xf32>
    %114 = arith.mulf %98, %106 : vector<2x128xf32>
    %115 = arith.addf %113, %114 : vector<2x128xf32>
    %116 = math.tanh %115 : vector<2x128xf32>
    %117 = arith.mulf %112, %116 : vector<2x128xf32>
    %118 = arith.index_cast %c2_i32 : i32 to index
    %c0_33 = arith.constant 0 : index
    %c0_34 = arith.constant 0 : index
    %119 = vector.load %arg11[%118, %c0_33, %c0_34] : memref<8x2x128xf32, #tpu.memory_space<vmem>>, vector<1x2x128xf32>
    %120 = vector.shape_cast %119 : vector<1x2x128xf32> to vector<2x128xf32>
    %121 = vector.shape_cast %117 : vector<2x128xf32> to vector<1x2x128xf32>
    tpu.vector_store %arg11[%118, %c0_33, %c0_34], %121 {strides = array<i32>} : memref<8x2x128xf32, #tpu.memory_space<vmem>>, vector<1x2x128xf32>,
    %c3_i32 = arith.constant 3 : i32
    %122 = arith.index_cast %c3_i32 : i32 to index
    %c0_35 = arith.constant 0 : index
    %c0_36 = arith.constant 0 : index
    %123 = vector.load %arg0[%122, %c0_35, %c0_36] : memref<8x2x16xf32, #tpu.memory_space<vmem>>, vector<1x2x16xf32>
    %124 = vector.shape_cast %123 : vector<1x2x16xf32> to vector<2x16xf32>
    %125 = arith.truncf %124 : vector<2x16xf32> to vector<2x16xbf16>
    %cst_37 = arith.constant dense<0.000000e+00> : vector<2x512xf32>
    %126 = tpu.matmul %125, %0, %cst_37 {dimension_numbers = #tpu.dot_dimension_numbers<[1], [0], [0], [1], [0, 0, 1, 1], [], []>} : vector<2x16xbf16>, vector<16x512xbf16>, vector<2x512xf32> -> vector<2x512xf32>
    %127 = arith.truncf %117 : vector<2x128xf32> to vector<2x128xbf16>
    %cst_38 = arith.constant dense<0.000000e+00> : vector<2x512xf32>
    %128 = tpu.matmul %127, %1, %cst_38 {dimension_numbers = #tpu.dot_dimension_numbers<[1], [0], [0], [1], [0, 0, 1, 1], [], []>} : vector<2x128xbf16>, vector<128x512xbf16>, vector<2x512xf32> -> vector<2x512xf32>
    %129 = arith.addf %126, %128 : vector<2x512xf32>
    %130 = vector.broadcast %2 : vector<1x512xf32> to vector<2x512xf32>
    %131 = arith.addf %129, %130 : vector<2x512xf32>
    %132 = vector.extract_strided_slice %131 {offsets = [0, 0], sizes = [2, 128], strides = [1, 1]} : vector<2x512xf32> to vector<2x128xf32>
    %133 = arith.negf %132 : vector<2x128xf32>
    %134 = math.exp %133 : vector<2x128xf32>
    %cst_39 = arith.constant 1.000000e+00 : f32
    %135 = vector.broadcast %cst_39 : f32 to vector<2x128xf32>
    %136 = arith.addf %135, %134 : vector<2x128xf32>
    %137 = arith.divf %135, %136 : vector<2x128xf32>
    %138 = vector.extract_strided_slice %131 {offsets = [0, 128], sizes = [2, 128], strides = [1, 1]} : vector<2x512xf32> to vector<2x128xf32>
    %139 = arith.negf %138 : vector<2x128xf32>
    %140 = math.exp %139 : vector<2x128xf32>
    %cst_40 = arith.constant 1.000000e+00 : f32
    %141 = vector.broadcast %cst_40 : f32 to vector<2x128xf32>
    %142 = arith.addf %141, %140 : vector<2x128xf32>
    %143 = arith.divf %141, %142 : vector<2x128xf32>
    %144 = vector.extract_strided_slice %131 {offsets = [0, 256], sizes = [2, 128], strides = [1, 1]} : vector<2x512xf32> to vector<2x128xf32>
    %145 = math.tanh %144 : vector<2x128xf32>
    %146 = vector.extract_strided_slice %131 {offsets = [0, 384], sizes = [2, 128], strides = [1, 1]} : vector<2x512xf32> to vector<2x128xf32>
    %147 = arith.negf %146 : vector<2x128xf32>
    %148 = math.exp %147 : vector<2x128xf32>
    %cst_41 = arith.constant 1.000000e+00 : f32
    %149 = vector.broadcast %cst_41 : f32 to vector<2x128xf32>
    %150 = arith.addf %149, %148 : vector<2x128xf32>
    %151 = arith.divf %149, %150 : vector<2x128xf32>
    %152 = arith.mulf %143, %115 : vector<2x128xf32>
    %153 = arith.mulf %137, %145 : vector<2x128xf32>
    %154 = arith.addf %152, %153 : vector<2x128xf32>
    %155 = math.tanh %154 : vector<2x128xf32>
    %156 = arith.mulf %151, %155 : vector<2x128xf32>
    %157 = arith.index_cast %c3_i32 : i32 to index
    %c0_42 = arith.constant 0 : index
    %c0_43 = arith.constant 0 : index
    %158 = vector.load %arg11[%157, %c0_42, %c0_43] : memref<8x2x128xf32, #tpu.memory_space<vmem>>, vector<1x2x128xf32>
    %159 = vector.shape_cast %158 : vector<1x2x128xf32> to vector<2x128xf32>
    %160 = vector.shape_cast %156 : vector<2x128xf32> to vector<1x2x128xf32>
    tpu.vector_store %arg11[%157, %c0_42, %c0_43], %160 {strides = array<i32>} : memref<8x2x128xf32, #tpu.memory_space<vmem>>, vector<1x2x128xf32>,
    %c4_i32 = arith.constant 4 : i32
    %161 = arith.index_cast %c4_i32 : i32 to index
    %c0_44 = arith.constant 0 : index
    %c0_45 = arith.constant 0 : index
    %162 = vector.load %arg0[%161, %c0_44, %c0_45] : memref<8x2x16xf32, #tpu.memory_space<vmem>>, vector<1x2x16xf32>
    %163 = vector.shape_cast %162 : vector<1x2x16xf32> to vector<2x16xf32>
    %164 = arith.truncf %163 : vector<2x16xf32> to vector<2x16xbf16>
    %cst_46 = arith.constant dense<0.000000e+00> : vector<2x512xf32>
    %165 = tpu.matmul %164, %0, %cst_46 {dimension_numbers = #tpu.dot_dimension_numbers<[1], [0], [0], [1], [0, 0, 1, 1], [], []>} : vector<2x16xbf16>, vector<16x512xbf16>, vector<2x512xf32> -> vector<2x512xf32>
    %166 = arith.truncf %156 : vector<2x128xf32> to vector<2x128xbf16>
    %cst_47 = arith.constant dense<0.000000e+00> : vector<2x512xf32>
    %167 = tpu.matmul %166, %1, %cst_47 {dimension_numbers = #tpu.dot_dimension_numbers<[1], [0], [0], [1], [0, 0, 1, 1], [], []>} : vector<2x128xbf16>, vector<128x512xbf16>, vector<2x512xf32> -> vector<2x512xf32>
    %168 = arith.addf %165, %167 : vector<2x512xf32>
    %169 = vector.broadcast %2 : vector<1x512xf32> to vector<2x512xf32>
    %170 = arith.addf %168, %169 : vector<2x512xf32>
    %171 = vector.extract_strided_slice %170 {offsets = [0, 0], sizes = [2, 128], strides = [1, 1]} : vector<2x512xf32> to vector<2x128xf32>
    %172 = arith.negf %171 : vector<2x128xf32>
    %173 = math.exp %172 : vector<2x128xf32>
    %cst_48 = arith.constant 1.000000e+00 : f32
    %174 = vector.broadcast %cst_48 : f32 to vector<2x128xf32>
    %175 = arith.addf %174, %173 : vector<2x128xf32>
    %176 = arith.divf %174, %175 : vector<2x128xf32>
    %177 = vector.extract_strided_slice %170 {offsets = [0, 128], sizes = [2, 128], strides = [1, 1]} : vector<2x512xf32> to vector<2x128xf32>
    %178 = arith.negf %177 : vector<2x128xf32>
    %179 = math.exp %178 : vector<2x128xf32>
    %cst_49 = arith.constant 1.000000e+00 : f32
    %180 = vector.broadcast %cst_49 : f32 to vector<2x128xf32>
    %181 = arith.addf %180, %179 : vector<2x128xf32>
    %182 = arith.divf %180, %181 : vector<2x128xf32>
    %183 = vector.extract_strided_slice %170 {offsets = [0, 256], sizes = [2, 128], strides = [1, 1]} : vector<2x512xf32> to vector<2x128xf32>
    %184 = math.tanh %183 : vector<2x128xf32>
    %185 = vector.extract_strided_slice %170 {offsets = [0, 384], sizes = [2, 128], strides = [1, 1]} : vector<2x512xf32> to vector<2x128xf32>
    %186 = arith.negf %185 : vector<2x128xf32>
    %187 = math.exp %186 : vector<2x128xf32>
    %cst_50 = arith.constant 1.000000e+00 : f32
    %188 = vector.broadcast %cst_50 : f32 to vector<2x128xf32>
    %189 = arith.addf %188, %187 : vector<2x128xf32>
    %190 = arith.divf %188, %189 : vector<2x128xf32>
    %191 = arith.mulf %182, %154 : vector<2x128xf32>
    %192 = arith.mulf %176, %184 : vector<2x128xf32>
    %193 = arith.addf %191, %192 : vector<2x128xf32>
    %194 = math.tanh %193 : vector<2x128xf32>
    %195 = arith.mulf %190, %194 : vector<2x128xf32>
    %196 = arith.index_cast %c4_i32 : i32 to index
    %c0_51 = arith.constant 0 : index
    %c0_52 = arith.constant 0 : index
    %197 = vector.load %arg11[%196, %c0_51, %c0_52] : memref<8x2x128xf32, #tpu.memory_space<vmem>>, vector<1x2x128xf32>
    %198 = vector.shape_cast %197 : vector<1x2x128xf32> to vector<2x128xf32>
    %199 = vector.shape_cast %195 : vector<2x128xf32> to vector<1x2x128xf32>
    tpu.vector_store %arg11[%196, %c0_51, %c0_52], %199 {strides = array<i32>} : memref<8x2x128xf32, #tpu.memory_space<vmem>>, vector<1x2x128xf32>,
    %c5_i32 = arith.constant 5 : i32
    %200 = arith.index_cast %c5_i32 : i32 to index
    %c0_53 = arith.constant 0 : index
    %c0_54 = arith.constant 0 : index
    %201 = vector.load %arg0[%200, %c0_53, %c0_54] : memref<8x2x16xf32, #tpu.memory_space<vmem>>, vector<1x2x16xf32>
    %202 = vector.shape_cast %201 : vector<1x2x16xf32> to vector<2x16xf32>
    %203 = arith.truncf %202 : vector<2x16xf32> to vector<2x16xbf16>
    %cst_55 = arith.constant dense<0.000000e+00> : vector<2x512xf32>
    %204 = tpu.matmul %203, %0, %cst_55 {dimension_numbers = #tpu.dot_dimension_numbers<[1], [0], [0], [1], [0, 0, 1, 1], [], []>} : vector<2x16xbf16>, vector<16x512xbf16>, vector<2x512xf32> -> vector<2x512xf32>
    %205 = arith.truncf %195 : vector<2x128xf32> to vector<2x128xbf16>
    %cst_56 = arith.constant dense<0.000000e+00> : vector<2x512xf32>
    %206 = tpu.matmul %205, %1, %cst_56 {dimension_numbers = #tpu.dot_dimension_numbers<[1], [0], [0], [1], [0, 0, 1, 1], [], []>} : vector<2x128xbf16>, vector<128x512xbf16>, vector<2x512xf32> -> vector<2x512xf32>
    %207 = arith.addf %204, %206 : vector<2x512xf32>
    %208 = vector.broadcast %2 : vector<1x512xf32> to vector<2x512xf32>
    %209 = arith.addf %207, %208 : vector<2x512xf32>
    %210 = vector.extract_strided_slice %209 {offsets = [0, 0], sizes = [2, 128], strides = [1, 1]} : vector<2x512xf32> to vector<2x128xf32>
    %211 = arith.negf %210 : vector<2x128xf32>
    %212 = math.exp %211 : vector<2x128xf32>
    %cst_57 = arith.constant 1.000000e+00 : f32
    %213 = vector.broadcast %cst_57 : f32 to vector<2x128xf32>
    %214 = arith.addf %213, %212 : vector<2x128xf32>
    %215 = arith.divf %213, %214 : vector<2x128xf32>
    %216 = vector.extract_strided_slice %209 {offsets = [0, 128], sizes = [2, 128], strides = [1, 1]} : vector<2x512xf32> to vector<2x128xf32>
    %217 = arith.negf %216 : vector<2x128xf32>
    %218 = math.exp %217 : vector<2x128xf32>
    %cst_58 = arith.constant 1.000000e+00 : f32
    %219 = vector.broadcast %cst_58 : f32 to vector<2x128xf32>
    %220 = arith.addf %219, %218 : vector<2x128xf32>
    %221 = arith.divf %219, %220 : vector<2x128xf32>
    %222 = vector.extract_strided_slice %209 {offsets = [0, 256], sizes = [2, 128], strides = [1, 1]} : vector<2x512xf32> to vector<2x128xf32>
    %223 = math.tanh %222 : vector<2x128xf32>
    %224 = vector.extract_strided_slice %209 {offsets = [0, 384], sizes = [2, 128], strides = [1, 1]} : vector<2x512xf32> to vector<2x128xf32>
    %225 = arith.negf %224 : vector<2x128xf32>
    %226 = math.exp %225 : vector<2x128xf32>
    %cst_59 = arith.constant 1.000000e+00 : f32
    %227 = vector.broadcast %cst_59 : f32 to vector<2x128xf32>
    %228 = arith.addf %227, %226 : vector<2x128xf32>
    %229 = arith.divf %227, %228 : vector<2x128xf32>
    %230 = arith.mulf %221, %193 : vector<2x128xf32>
    %231 = arith.mulf %215, %223 : vector<2x128xf32>
    %232 = arith.addf %230, %231 : vector<2x128xf32>
    %233 = math.tanh %232 : vector<2x128xf32>
    %234 = arith.mulf %229, %233 : vector<2x128xf32>
    %235 = arith.index_cast %c5_i32 : i32 to index
    %c0_60 = arith.constant 0 : index
    %c0_61 = arith.constant 0 : index
    %236 = vector.load %arg11[%235, %c0_60, %c0_61] : memref<8x2x128xf32, #tpu.memory_space<vmem>>, vector<1x2x128xf32>
    %237 = vector.shape_cast %236 : vector<1x2x128xf32> to vector<2x128xf32>
    %238 = vector.shape_cast %234 : vector<2x128xf32> to vector<1x2x128xf32>
    tpu.vector_store %arg11[%235, %c0_60, %c0_61], %238 {strides = array<i32>} : memref<8x2x128xf32, #tpu.memory_space<vmem>>, vector<1x2x128xf32>,
    %c6_i32 = arith.constant 6 : i32
    %239 = arith.index_cast %c6_i32 : i32 to index
    %c0_62 = arith.constant 0 : index
    %c0_63 = arith.constant 0 : index
    %240 = vector.load %arg0[%239, %c0_62, %c0_63] : memref<8x2x16xf32, #tpu.memory_space<vmem>>, vector<1x2x16xf32>
    %241 = vector.shape_cast %240 : vector<1x2x16xf32> to vector<2x16xf32>
    %242 = arith.truncf %241 : vector<2x16xf32> to vector<2x16xbf16>
    %cst_64 = arith.constant dense<0.000000e+00> : vector<2x512xf32>
    %243 = tpu.matmul %242, %0, %cst_64 {dimension_numbers = #tpu.dot_dimension_numbers<[1], [0], [0], [1], [0, 0, 1, 1], [], []>} : vector<2x16xbf16>, vector<16x512xbf16>, vector<2x512xf32> -> vector<2x512xf32>
    %244 = arith.truncf %234 : vector<2x128xf32> to vector<2x128xbf16>
    %cst_65 = arith.constant dense<0.000000e+00> : vector<2x512xf32>
    %245 = tpu.matmul %244, %1, %cst_65 {dimension_numbers = #tpu.dot_dimension_numbers<[1], [0], [0], [1], [0, 0, 1, 1], [], []>} : vector<2x128xbf16>, vector<128x512xbf16>, vector<2x512xf32> -> vector<2x512xf32>
    %246 = arith.addf %243, %245 : vector<2x512xf32>
    %247 = vector.broadcast %2 : vector<1x512xf32> to vector<2x512xf32>
    %248 = arith.addf %246, %247 : vector<2x512xf32>
    %249 = vector.extract_strided_slice %248 {offsets = [0, 0], sizes = [2, 128], strides = [1, 1]} : vector<2x512xf32> to vector<2x128xf32>
    %250 = arith.negf %249 : vector<2x128xf32>
    %251 = math.exp %250 : vector<2x128xf32>
    %cst_66 = arith.constant 1.000000e+00 : f32
    %252 = vector.broadcast %cst_66 : f32 to vector<2x128xf32>
    %253 = arith.addf %252, %251 : vector<2x128xf32>
    %254 = arith.divf %252, %253 : vector<2x128xf32>
    %255 = vector.extract_strided_slice %248 {offsets = [0, 128], sizes = [2, 128], strides = [1, 1]} : vector<2x512xf32> to vector<2x128xf32>
    %256 = arith.negf %255 : vector<2x128xf32>
    %257 = math.exp %256 : vector<2x128xf32>
    %cst_67 = arith.constant 1.000000e+00 : f32
    %258 = vector.broadcast %cst_67 : f32 to vector<2x128xf32>
    %259 = arith.addf %258, %257 : vector<2x128xf32>
    %260 = arith.divf %258, %259 : vector<2x128xf32>
    %261 = vector.extract_strided_slice %248 {offsets = [0, 256], sizes = [2, 128], strides = [1, 1]} : vector<2x512xf32> to vector<2x128xf32>
    %262 = math.tanh %261 : vector<2x128xf32>
    %263 = vector.extract_strided_slice %248 {offsets = [0, 384], sizes = [2, 128], strides = [1, 1]} : vector<2x512xf32> to vector<2x128xf32>
    %264 = arith.negf %263 : vector<2x128xf32>
    %265 = math.exp %264 : vector<2x128xf32>
    %cst_68 = arith.constant 1.000000e+00 : f32
    %266 = vector.broadcast %cst_68 : f32 to vector<2x128xf32>
    %267 = arith.addf %266, %265 : vector<2x128xf32>
    %268 = arith.divf %266, %267 : vector<2x128xf32>
    %269 = arith.mulf %260, %232 : vector<2x128xf32>
    %270 = arith.mulf %254, %262 : vector<2x128xf32>
    %271 = arith.addf %269, %270 : vector<2x128xf32>
    %272 = math.tanh %271 : vector<2x128xf32>
    %273 = arith.mulf %268, %272 : vector<2x128xf32>
    %274 = arith.index_cast %c6_i32 : i32 to index
    %c0_69 = arith.constant 0 : index
    %c0_70 = arith.constant 0 : index
    %275 = vector.load %arg11[%274, %c0_69, %c0_70] : memref<8x2x128xf32, #tpu.memory_space<vmem>>, vector<1x2x128xf32>
    %276 = vector.shape_cast %275 : vector<1x2x128xf32> to vector<2x128xf32>
    %277 = vector.shape_cast %273 : vector<2x128xf32> to vector<1x2x128xf32>
    tpu.vector_store %arg11[%274, %c0_69, %c0_70], %277 {strides = array<i32>} : memref<8x2x128xf32, #tpu.memory_space<vmem>>, vector<1x2x128xf32>,
    %c7_i32 = arith.constant 7 : i32
    %278 = arith.index_cast %c7_i32 : i32 to index
    %c0_71 = arith.constant 0 : index
    %c0_72 = arith.constant 0 : index
    %279 = vector.load %arg0[%278, %c0_71, %c0_72] : memref<8x2x16xf32, #tpu.memory_space<vmem>>, vector<1x2x16xf32>
    %280 = vector.shape_cast %279 : vector<1x2x16xf32> to vector<2x16xf32>
    %281 = arith.truncf %280 : vector<2x16xf32> to vector<2x16xbf16>
    %cst_73 = arith.constant dense<0.000000e+00> : vector<2x512xf32>
    %282 = tpu.matmul %281, %0, %cst_73 {dimension_numbers = #tpu.dot_dimension_numbers<[1], [0], [0], [1], [0, 0, 1, 1], [], []>} : vector<2x16xbf16>, vector<16x512xbf16>, vector<2x512xf32> -> vector<2x512xf32>
    %283 = arith.truncf %273 : vector<2x128xf32> to vector<2x128xbf16>
    %cst_74 = arith.constant dense<0.000000e+00> : vector<2x512xf32>
    %284 = tpu.matmul %283, %1, %cst_74 {dimension_numbers = #tpu.dot_dimension_numbers<[1], [0], [0], [1], [0, 0, 1, 1], [], []>} : vector<2x128xbf16>, vector<128x512xbf16>, vector<2x512xf32> -> vector<2x512xf32>
    %285 = arith.addf %282, %284 : vector<2x512xf32>
    %286 = vector.broadcast %2 : vector<1x512xf32> to vector<2x512xf32>
    %287 = arith.addf %285, %286 : vector<2x512xf32>
    %288 = vector.extract_strided_slice %287 {offsets = [0, 0], sizes = [2, 128], strides = [1, 1]} : vector<2x512xf32> to vector<2x128xf32>
    %289 = arith.negf %288 : vector<2x128xf32>
    %290 = math.exp %289 : vector<2x128xf32>
    %cst_75 = arith.constant 1.000000e+00 : f32
    %291 = vector.broadcast %cst_75 : f32 to vector<2x128xf32>
    %292 = arith.addf %291, %290 : vector<2x128xf32>
    %293 = arith.divf %291, %292 : vector<2x128xf32>
    %294 = vector.extract_strided_slice %287 {offsets = [0, 128], sizes = [2, 128], strides = [1, 1]} : vector<2x512xf32> to vector<2x128xf32>
    %295 = arith.negf %294 : vector<2x128xf32>
    %296 = math.exp %295 : vector<2x128xf32>
    %cst_76 = arith.constant 1.000000e+00 : f32
    %297 = vector.broadcast %cst_76 : f32 to vector<2x128xf32>
    %298 = arith.addf %297, %296 : vector<2x128xf32>
    %299 = arith.divf %297, %298 : vector<2x128xf32>
    %300 = vector.extract_strided_slice %287 {offsets = [0, 256], sizes = [2, 128], strides = [1, 1]} : vector<2x512xf32> to vector<2x128xf32>
    %301 = math.tanh %300 : vector<2x128xf32>
    %302 = vector.extract_strided_slice %287 {offsets = [0, 384], sizes = [2, 128], strides = [1, 1]} : vector<2x512xf32> to vector<2x128xf32>
    %303 = arith.negf %302 : vector<2x128xf32>
    %304 = math.exp %303 : vector<2x128xf32>
    %cst_77 = arith.constant 1.000000e+00 : f32
    %305 = vector.broadcast %cst_77 : f32 to vector<2x128xf32>
    %306 = arith.addf %305, %304 : vector<2x128xf32>
    %307 = arith.divf %305, %306 : vector<2x128xf32>
    %308 = arith.mulf %299, %271 : vector<2x128xf32>
    %309 = arith.mulf %293, %301 : vector<2x128xf32>
    %310 = arith.addf %308, %309 : vector<2x128xf32>
    %311 = math.tanh %310 : vector<2x128xf32>
    %312 = arith.mulf %307, %311 : vector<2x128xf32>
    %313 = arith.index_cast %c7_i32 : i32 to index
    %c0_78 = arith.constant 0 : index
    %c0_79 = arith.constant 0 : index
    %314 = vector.load %arg11[%313, %c0_78, %c0_79] : memref<8x2x128xf32, #tpu.memory_space<vmem>>, vector<1x2x128xf32>
    %315 = vector.shape_cast %314 : vector<1x2x128xf32> to vector<2x128xf32>
    %316 = vector.shape_cast %312 : vector<2x128xf32> to vector<1x2x128xf32>
    tpu.vector_store %arg11[%313, %c0_78, %c0_79], %316 {strides = array<i32>} : memref<8x2x128xf32, #tpu.memory_space<vmem>>, vector<1x2x128xf32>,
    %c8_i32 = arith.constant 8 : i32
    %c0_80 = arith.constant 0 : index
    %c0_81 = arith.constant 0 : index
    %c0_82 = arith.constant 0 : index
    %317 = vector.load %arg11[%c0_80, %c0_81, %c0_82] : memref<8x2x128xf32, #tpu.memory_space<vmem>>, vector<8x2x128xf32>
    %c0_83 = arith.constant 0 : index
    %c0_84 = arith.constant 0 : index
    %318 = vector.load %arg6[%c0_83, %c0_84] : memref<1x128xf32, #tpu.memory_space<vmem>>, vector<1x128xf32>
    %319 = vector.shape_cast %318 : vector<1x128xf32> to vector<1x1x128xf32>
    %320 = vector.broadcast %319 : vector<1x1x128xf32> to vector<8x2x128xf32>
    %321 = arith.mulf %317, %320 : vector<8x2x128xf32>
    %cst_85 = arith.constant dense<0.000000e+00> : vector<8x2xf32>
    %322 = vector.multi_reduction <add>, %321, %cst_85 [2] : vector<8x2x128xf32> to vector<8x2xf32>
    %c0_86 = arith.constant 0 : index
    %c0_87 = arith.constant 0 : index
    %323 = memref.load %arg7[%c0_86, %c0_87] : memref<1x1xf32, #tpu.memory_space<smem>>
    %324 = vector.broadcast %323 : f32 to vector<8x2xf32>
    %325 = arith.addf %322, %324 : vector<8x2xf32>
    %326 = arith.negf %325 : vector<8x2xf32>
    %327 = math.exp %326 : vector<8x2xf32>
    %cst_88 = arith.constant 1.000000e+00 : f32
    %328 = vector.broadcast %cst_88 : f32 to vector<8x2xf32>
    %329 = arith.addf %328, %327 : vector<8x2xf32>
    %330 = arith.divf %328, %329 : vector<8x2xf32>
    %c0_89 = arith.constant 0 : index
    %c0_90 = arith.constant 0 : index
    %331 = vector.load %arg8[%c0_89, %c0_90] : memref<8x2xf32, #tpu.memory_space<vmem>>, vector<8x2xf32>
    tpu.vector_store %arg8[%c0_89, %c0_90], %330 {strides = array<i32>} : memref<8x2xf32, #tpu.memory_space<vmem>>, vector<8x2xf32>,
    %c0_91 = arith.constant 0 : index
    %c0_92 = arith.constant 0 : index
    %332 = vector.load %arg9[%c0_91, %c0_92] : memref<2x128xf32, #tpu.memory_space<vmem>>, vector<2x128xf32>
    tpu.vector_store %arg9[%c0_91, %c0_92], %312 {strides = array<i32>} : memref<2x128xf32, #tpu.memory_space<vmem>>, vector<2x128xf32>,
    %c0_93 = arith.constant 0 : index
    %c0_94 = arith.constant 0 : index
    %333 = vector.load %arg10[%c0_93, %c0_94] : memref<2x128xf32, #tpu.memory_space<vmem>>, vector<2x128xf32>
    tpu.vector_store %arg10[%c0_93, %c0_94], %310 {strides = array<i32>} : memref<2x128xf32, #tpu.memory_space<vmem>>, vector<2x128xf32>,
    return
  }
}

</mosaic_0001>

<llo_original>
// kernel: _rnn_gate_steps.1
$region0: #{_rnn_gate_steps.1}
  #allocation0 [shape = 'u32[]', space=smem, size = 0x4, offset = 0x4, fixed_abs, tag = 'smem constant byte address 0x4 - core index']
  #allocation1 [shape = 'u32[144,128]{1,0:T(1,128)}', space=vmem, size = 0x12000, scoped, tag = 'internal scratch']
  #allocation2 [shape = 'f32[8,2,128]{2,1,0:T(2,128)}', space=vmem, size = 0x2000, scoped, tag = 'scratch operand']
  #allocation3 [shape = 'f32[1,1]{1,0:T(1,128)S(6)}', space=smem, size = 0x200, scoped, tag = 'scoped memory for _rnn_gate_steps.1']
  %s0 = inlined_call_operand.hbm [shape: f32[8,2,16], index: 0, kind: input, shape index: {}]
  %s1 = inlined_call_operand.vmem [shape: f32[2,128], index: 1, kind: input, shape index: {}, may-alias: {1,9}]
  %s2 = inlined_call_operand.hbm [shape: f32[2,128], index: 2, kind: input, shape index: {}, may-alias: {2,10}]
  %s3 = inlined_call_operand.hbm [shape: bf16[16,512], index: 3, kind: input, shape index: {}]
  %s4 = inlined_call_operand.hbm [shape: bf16[128,512], index: 4, kind: input, shape index: {}]
  %s5 = inlined_call_operand.vmem [shape: f32[1,512], index: 5, kind: input, shape index: {}]
  %s6 = inlined_call_operand.vmem [shape: f32[1,128], index: 6, kind: input, shape index: {}]
  %s7 = inlined_call_operand.<no memory space> [shape: f32[1,1], index: 7, kind: input, shape index: {}]
  %s8 = inlined_call_operand.vmem [shape: f32[8,2], index: 8, kind: output, shape index: {0}]
  %s9 = inlined_call_operand.vmem [shape: f32[2,128], index: 9, kind: output, shape index: {1}, may-alias: {1,9}]
  %s10 = inlined_call_operand.hbm [shape: f32[2,128], index: 10, kind: output, shape index: {2}, may-alias: {2,10}]
  %11 = xla_tuple %s8, %s9, %s10
  %s12 = sld [smem:[#allocation0]]
  $region74: #{_rnn_gate_steps.1} parent=0
    _
  %s14 = ssub.s32 1, %s12
  %s15 = scalar_select 0, %s14, %s12
  %16 = sst [smem:[#allocation3]] %s7
  $region1: #{_rnn_gate_steps.1} parent=0
    #allocation4 [shape = 'u8[8192]{0}', space=vmem, size = 0x2000, scoped, tag = 'input window, operand 0, single buffered']
    #allocation5 [shape = 's32[1]{0}', space=sflag, size = 0x4, scoped, tag = 'scoped memory for _rnn_gate_steps.1']
    #allocation6 [shape = 's32[1]{0}', space=sflag, size = 0x4, scoped, tag = 'scoped memory for _rnn_gate_steps.1']
    #allocation7 [shape = 'u8[1024]{0}', space=vmem, size = 0x400, scoped, tag = 'input window, operand 2, single buffered']
    #allocation8 [shape = 's32[1]{0}', space=sflag, size = 0x4, scoped, tag = 'scoped memory for _rnn_gate_steps.1']
    #allocation9 [shape = 'u8[16384]{0}', space=vmem, size = 0x4000, scoped, tag = 'input window, operand 3, single buffered']
    #allocation10 [shape = 'u8[131072]{0}', space=vmem, size = 0x20000, scoped, tag = 'input window, operand 4, single buffered']
    #allocation11 [shape = 's32[1]{0}', space=sflag, size = 0x4, scoped, tag = 'scoped memory for _rnn_gate_steps.1']
    #allocation12 [shape = 'u8[1024]{0}', space=vmem, size = 0x400, scoped, tag = 'output window, operand 2, single buffered']
    %17 = vsyncpa [#allocation5], 0
    %18 = vsyncpa [#allocation8], 0
    %19 = vsyncpa [#allocation11], 0
    %20 = vsyncpa [#allocation6], 0
    // Predicated region
    $region2: #{_rnn_gate_steps.1} parent=1 // pred_check
      _
    $region3: #{_rnn_gate_steps.1} parent=1 // pred_check_branch
      %22 = sbr.rel (0) target = $region5
    $region4: #{_rnn_gate_steps.1} parent=1 // pred_region
      %s24 = ssub.s32 256, 256
      %25 = vsyncadd [#allocation5], %s24
      %s26 = sshll.u32 [#allocation4], 4
      %s27 = int_to_ptr.vmem [resolvable:$true] %s26
      %32 = dma.hbm_to_vmem [thread:$0]  %s0, 256, %s27, [#allocation5], 32, 32, 2
    $region5: #{_rnn_gate_steps.1} parent=1 // pred_fallthru
      _
    // Predicated region
    $region6: #{_rnn_gate_steps.1} parent=1 // pred_check
      _
    $region7: #{_rnn_gate_steps.1} parent=1 // pred_check_branch
      %34 = sbr.rel (0) target = $region9
    $region8: #{_rnn_gate_steps.1} parent=1 // pred_region
      _
    $region9: #{_rnn_gate_steps.1} parent=1 // pred_fallthru
      _
    // Predicated region
    $region10: #{_rnn_gate_steps.1} parent=1 // pred_check
      _
    $region11: #{_rnn_gate_steps.1} parent=1 // pred_check_branch
      %36 = sbr.rel (0) target = $region13
    $region12: #{_rnn_gate_steps.1} parent=1 // pred_region
      %s38 = ssub.s32 32, 32
      %39 = vsyncadd [#allocation8], %s38
      %s41 = sshll.u32 [#allocation7], 4
      %s42 = int_to_ptr.vmem [resolvable:$true] %s41
      %44 = dma.hbm_to_vmem [thread:$0]  %s2, 32, %s42, [#allocation8]
    $region13: #{_rnn_gate_steps.1} parent=1 // pred_fallthru
      _
    // Predicated region
    $region14: #{_rnn_gate_steps.1} parent=1 // pred_check
      _
    $region15: #{_rnn_gate_steps.1} parent=1 // pred_check_branch
      %46 = sbr.rel (0) target = $region17
    $region16: #{_rnn_gate_steps.1} parent=1 // pred_region
      %s48 = ssub.s32 512, 512
      %49 = vsyncadd [#allocation8], %s48
      %s50 = sshll.u32 [#allocation9], 4
      %s51 = int_to_ptr.vmem [resolvable:$true] %s50
      %56 = dma.hbm_to_vmem [thread:$0]  %s3, 512, %s51, [#allocation8], 256, 256, 16
    $region17: #{_rnn_gate_steps.1} parent=1 // pred_fallthru
      _
    // Predicated region
    $region18: #{_rnn_gate_steps.1} parent=1 // pred_check
      _
    $region19: #{_rnn_gate_steps.1} parent=1 // pred_check_branch
      %58 = sbr.rel (0) target = $region21
    $region20: #{_rnn_gate_steps.1} parent=1 // pred_region
      %s60 = ssub.s32 4096, 4096
      %61 = vsyncadd [#allocation11], %s60
      %s62 = sshll.u32 [#allocation10], 4
      %s63 = int_to_ptr.vmem [resolvable:$true] %s62
      %68 = dma.hbm_to_vmem [thread:$0]  %s4, 4096, %s63, [#allocation11], 256, 256, 16
    $region21: #{_rnn_gate_steps.1} parent=1 // pred_fallthru
      _
    // Predicated region
    $region22: #{_rnn_gate_steps.1} parent=1 // pred_check
      _
    $region23: #{_rnn_gate_steps.1} parent=1 // pred_check_branch
      %70 = sbr.rel (0) target = $region25
    $region24: #{_rnn_gate_steps.1} parent=1 // pred_region
      _
    $region25: #{_rnn_gate_steps.1} parent=1 // pred_fallthru
      _
    // Predicated region
    $region26: #{_rnn_gate_steps.1} parent=1 // pred_check
      _
    $region27: #{_rnn_gate_steps.1} parent=1 // pred_check_branch
      %72 = sbr.rel (0) target = $region29
    $region28: #{_rnn_gate_steps.1} parent=1 // pred_region
      _
    $region29: #{_rnn_gate_steps.1} parent=1 // pred_fallthru
      _
    // Predicated region
    $region30: #{_rnn_gate_steps.1} parent=1 // pred_check
      _
    $region31: #{_rnn_gate_steps.1} parent=1 // pred_check_branch
      %74 = sbr.rel (0) target = $region33
    $region32: #{_rnn_gate_steps.1} parent=1 // pred_region
      _
    $region33: #{_rnn_gate_steps.1} parent=1 // pred_fallthru
      _
    // Predicated region
    $region34: #{_rnn_gate_steps.1} parent=1 // pred_check
      _
    $region35: #{_rnn_gate_steps.1} parent=1 // pred_check_branch
      %76 = sbr.rel (0) target = $region37
    $region36: #{_rnn_gate_steps.1} parent=1 // pred_region
      %77 = dma.done [#allocation5], 256
    $region37: #{_rnn_gate_steps.1} parent=1 // pred_fallthru
      _
    // Predicated region
    $region38: #{_rnn_gate_steps.1} parent=1 // pred_check
      _
    $region39: #{_rnn_gate_steps.1} parent=1 // pred_check_branch
      %79 = sbr.rel (0) target = $region41
    $region40: #{_rnn_gate_steps.1} parent=1 // pred_region
      %80 = dma.done [#allocation8], 32
    $region41: #{_rnn_gate_steps.1} parent=1 // pred_fallthru
      _
    // Predicated region
    $region42: #{_rnn_gate_steps.1} parent=1 // pred_check
      _
    $region43: #{_rnn_gate_steps.1} parent=1 // pred_check_branch
      %82 = sbr.rel (0) target = $region45
    $region44: #{_rnn_gate_steps.1} parent=1 // pred_region
      %83 = dma.done [#allocation8], 512
    $region45: #{_rnn_gate_steps.1} parent=1 // pred_fallthru
      _
    // Predicated region
    $region46: #{_rnn_gate_steps.1} parent=1 // pred_check
      _
    $region47: #{_rnn_gate_steps.1} parent=1 // pred_check_branch
      %85 = sbr.rel (0) target = $region49
    $region48: #{_rnn_gate_steps.1} parent=1 // pred_region
      %86 = dma.done [#allocation11], 4096
    $region49: #{_rnn_gate_steps.1} parent=1 // pred_fallthru
      _
    %v88 = vld [vmem:[#allocation9] sm:$0xff]
    %v89 = vld [vmem:[#allocation9 + $0x8] sm:$0xff]
    %v90 = vld [vmem:[#allocation9 + $0x10] sm:$0xff]
    %v91 = vld [vmem:[#allocation9 + $0x18] sm:$0xff]
    %v92 = vld [vmem:[#allocation10] sm:$0xff]
    %v93 = vld [vmem:[#allocation10 + $0x8] sm:$0xff]
    %v94 = vld [vmem:[#allocation10 + $0x10] sm:$0xff]
    %v95 = vld [vmem:[#allocation10 + $0x18] sm:$0xff]
    %v96 = vld [vmem:[#allocation10 + $0x20] sm:$0xff]
    %v97 = vld [vmem:[#allocation10 + $0x28] sm:$0xff]
    %v98 = vld [vmem:[#allocation10 + $0x30] sm:$0xff]
    %v99 = vld [vmem:[#allocation10 + $0x38] sm:$0xff]
    %v100 = vld [vmem:[#allocation10 + $0x40] sm:$0xff]
    %v101 = vld [vmem:[#allocation10 + $0x48] sm:$0xff]
    %v102 = vld [vmem:[#allocation10 + $0x50] sm:$0xff]
    %v103 = vld [vmem:[#allocation10 + $0x58] sm:$0xff]
    %v104 = vld [vmem:[#allocation10 + $0x60] sm:$0xff]
    %v105 = vld [vmem:[#allocation10 + $0x68] sm:$0xff]
    %v106 = vld [vmem:[#allocation10 + $0x70] sm:$0xff]
    %v107 = vld [vmem:[#allocation10 + $0x78] sm:$0xff]
    %v108 = vld [vmem:[#allocation10 + $0x80] sm:$0xff]
    %v109 = vld [vmem:[#allocation10 + $0x88] sm:$0xff]
    %v110 = vld [vmem:[#allocation10 + $0x90] sm:$0xff]
    %v111 = vld [vmem:[#allocation10 + $0x98] sm:$0xff]
    %v112 = vld [vmem:[#allocation10 + $0xa0] sm:$0xff]
    %v113 = vld [vmem:[#allocation10 + $0xa8] sm:$0xff]
    %v114 = vld [vmem:[#allocation10 + $0xb0] sm:$0xff]
    %v115 = vld [vmem:[#allocation10 + $0xb8] sm:$0xff]
    %v116 = vld [vmem:[#allocation10 + $0xc0] sm:$0xff]
    %v117 = vld [vmem:[#allocation10 + $0xc8] sm:$0xff]
    %v118 = vld [vmem:[#allocation10 + $0xd0] sm:$0xff]
    %v119 = vld [vmem:[#allocation10 + $0xd8] sm:$0xff]
    %v120 = vld [vmem:[#allocation10 + $0xe0] sm:$0xff]
    %v121 = vld [vmem:[#allocation10 + $0xe8] sm:$0xff]
    %v122 = vld [vmem:[#allocation10 + $0xf0] sm:$0xff]
    %v123 = vld [vmem:[#allocation10 + $0xf8] sm:$0xff]
    %v124 = vld [vmem:[%s5] sm:$0xf]
    %v125 = vld [vmem:[%s1] sm:$0x3]
    %v126 = vld [vmem:[#allocation7] sm:$0x3]
    %v127 = vld [vmem:[#allocation4] sm:$0x3]
    %v128 = vpack.c.bf16 %v127, %v127
    %v129 = vpack.c.bf16 %v125, %v125
    %v162 = vunpack.c.l.b16 %v92
    %v163 = vunpack.c.h.b16 %v92
    %v164 = vunpack.c.l.b16 %v93
    %v165 = vunpack.c.h.b16 %v93
    %v166 = vunpack.c.l.b16 %v94
    %v167 = vunpack.c.h.b16 %v94
    %v168 = vunpack.c.l.b16 %v95
    %v169 = vunpack.c.h.b16 %v95
    %v170 = vunpack.c.l.b16 %v96
    %v171 = vunpack.c.h.b16 %v96
    %v172 = vunpack.c.l.b16 %v97
    %v173 = vunpack.c.h.b16 %v97
    %v174 = vunpack.c.l.b16 %v98
    %v175 = vunpack.c.h.b16 %v98
    %v176 = vunpack.c.l.b16 %v99
    %v177 = vunpack.c.h.b16 %v99
    %v178 = vunpack.c.l.b16 %v100
    %v179 = vunpack.c.h.b16 %v100
    %v180 = vunpack.c.l.b16 %v101
    %v181 = vunpack.c.h.b16 %v101
    %v182 = vunpack.c.l.b16 %v102
    %v183 = vunpack.c.h.b16 %v102
    %v184 = vunpack.c.l.b16 %v103
    %v185 = vunpack.c.h.b16 %v103
    %v186 = vunpack.c.l.b16 %v104
    %v187 = vunpack.c.h.b16 %v104
    %v188 = vunpack.c.l.b16 %v105
    %v189 = vunpack.c.h.b16 %v105
    %v190 = vunpack.c.l.b16 %v106
    %v191 = vunpack.c.h.b16 %v106
    %v192 = vunpack.c.l.b16 %v107
    %v193 = vunpack.c.h.b16 %v107
    %v194 = vunpack.c.l.b16 %v108
    %v195 = vunpack.c.h.b16 %v108
    %v196 = vunpack.c.l.b16 %v109
    %v197 = vunpack.c.h.b16 %v109
    %v198 = vunpack.c.l.b16 %v110
    %v199 = vunpack.c.h.b16 %v110
    %v200 = vunpack.c.l.b16 %v111
    %v201 = vunpack.c.h.b16 %v111
    %v202 = vunpack.c.l.b16 %v112
    %v203 = vunpack.c.h.b16 %v112
    %v204 = vunpack.c.l.b16 %v113
    %v205 = vunpack.c.h.b16 %v113
    %v206 = vunpack.c.l.b16 %v114
    %v207 = vunpack.c.h.b16 %v114
    %v208 = vunpack.c.l.b16 %v115
    %v209 = vunpack.c.h.b16 %v115
    %v210 = vunpack.c.l.b16 %v116
    %v211 = vunpack.c.h.b16 %v116
    %v212 = vunpack.c.l.b16 %v117
    %v213 = vunpack.c.h.b16 %v117
    %v214 = vunpack.c.l.b16 %v118
    %v215 = vunpack.c.h.b16 %v118
    %v216 = vunpack.c.l.b16 %v119
    %v217 = vunpack.c.h.b16 %v119
    %v218 = vunpack.c.l.b16 %v120
    %v219 = vunpack.c.h.b16 %v120
    %v220 = vunpack.c.l.b16 %v121
    %v221 = vunpack.c.h.b16 %v121
    %v222 = vunpack.c.l.b16 %v122
    %v223 = vunpack.c.h.b16 %v122
    %v224 = vunpack.c.l.b16 %v123
    %v225 = vunpack.c.h.b16 %v123
    %v226 = vpack.c.b16 %v166, %v162
    %v227 = vpack.c.b16 %v167, %v163
    %v228 = vpack.c.b16 %v168, %v164
    %v229 = vpack.c.b16 %v169, %v165
    %v230 = vpack.c.b16 %v174, %v170
    %v231 = vpack.c.b16 %v175, %v171
    %v232 = vpack.c.b16 %v176, %v172
    %v233 = vpack.c.b16 %v177, %v173
    %v234 = vpack.c.b16 %v182, %v178
    %v235 = vpack.c.b16 %v183, %v179
    %v236 = vpack.c.b16 %v184, %v180
    %v237 = vpack.c.b16 %v185, %v181
    %v238 = vpack.c.b16 %v190, %v186
    %v239 = vpack.c.b16 %v191, %v187
    %v240 = vpack.c.b16 %v192, %v188
    %v241 = vpack.c.b16 %v193, %v189
    %v242 = vpack.c.b16 %v198, %v194
    %v243 = vpack.c.b16 %v199, %v195
    %v244 = vpack.c.b16 %v200, %v196
    %v245 = vpack.c.b16 %v201, %v197
    %v246 = vpack.c.b16 %v206, %v202
    %v247 = vpack.c.b16 %v207, %v203
    %v248 = vpack.c.b16 %v208, %v204
    %v249 = vpack.c.b16 %v209, %v205
    %v250 = vpack.c.b16 %v214, %v210
    %v251 = vpack.c.b16 %v215, %v211
    %v252 = vpack.c.b16 %v216, %v212
    %v253 = vpack.c.b16 %v217, %v213
    %v254 = vpack.c.b16 %v222, %v218
    %v255 = vpack.c.b16 %v223, %v219
    %v256 = vpack.c.b16 %v224, %v220
    %v257 = vpack.c.b16 %v225, %v221
    %290 = vmatprep.subr.bf16.mxu0 %v255
    %291 = vmatpush1.bf16.msra.mxu0 %v254
    %292 = vmatprep.subr.bf16.mxu0 %v251
    %293 = vmatpush1.bf16.msra.mxu0 %v250
    %294 = vmatprep.subr.bf16.mxu0 %v247
    %295 = vmatpush1.bf16.msra.mxu0 %v246
    %296 = vmatprep.subr.bf16.mxu0 %v243
    %297 = vmatpush1.bf16.msra.mxu0 %v242
    %298 = vmatprep.subr.bf16.mxu0 %v239
    %299 = vmatpush1.bf16.msra.mxu0 %v238
    %300 = vmatprep.subr.bf16.mxu0 %v235
    %301 = vmatpush1.bf16.msra.mxu0 %v234
    %302 = vmatprep.subr.bf16.mxu0 %v231
    %303 = vmatpush1.bf16.msra.mxu0 %v230
    %304 = vmatprep.subr.bf16.mxu0 %v227
    %305 = vmatpush1.bf16.msra.mxu0 %v226
    %306 = vmatprep.subr.bf16.mxu0 0
    %307 = vmatpush2.bf16.msra.mxu0 0
    %308 = vmatprep.subr.bf16.mxu0 0
    %309 = vmatpush2.bf16.msra.mxu0 0
    %310 = vmatprep.subr.bf16.mxu0 0
    %311 = vmatpush2.bf16.msra.mxu0 0
    %312 = vmatprep.subr.bf16.mxu0 0
    %313 = vmatpush2.bf16.msra.mxu0 0
    %314 = vmatprep.subr.bf16.mxu0 0
    %315 = vmatpush2.bf16.msra.mxu0 0
    %316 = vmatprep.subr.bf16.mxu0 0
    %317 = vmatpush2.bf16.msra.mxu0 0
    %318 = vmatprep.subr.bf16.mxu0 0
    %319 = vmatpush2.bf16.msra.mxu0 0
    %320 = vmatprep.subr.bf16.mxu0 0
    %321 = vmatpush2.bf16.msra.mxu0 0
    %322 = vmatprep.mubr.bf16.mxu0 0
    %323 = vmatmul.mubr.bf16.gmra.mxu0 %v129
    %v324 = vpop.f32.mrf.mxu0
    %v325 = vadd.f32 0.0, %v324
    %v326 = vpop.f32.mrf.mxu0
    %v327 = vadd.f32 0.0, %v326
    %v328 = vpop.f32.mrf.mxu0
    %v329 = vpop.f32.mrf.mxu0
    %330 = vdwg.mxu0
    %331 = vmatprep.subr.bf16.mxu0 %v257
    %332 = vmatpush1.bf16.msra.mxu0 %v256
    %333 = vmatprep.subr.bf16.mxu0 %v253
    %334 = vmatpush1.bf16.msra.mxu0 %v252
    %335 = vmatprep.subr.bf16.mxu0 %v249
    %336 = vmatpush1.bf16.msra.mxu0 %v248
    %337 = vmatprep.subr.bf16.mxu0 %v245
    %338 = vmatpush1.bf16.msra.mxu0 %v244
    %339 = vmatprep.subr.bf16.mxu0 %v241
    %340 = vmatpush1.bf16.msra.mxu0 %v240
    %341 = vmatprep.subr.bf16.mxu0 %v237
    %342 = vmatpush1.bf16.msra.mxu0 %v236
    %343 = vmatprep.subr.bf16.mxu0 %v233
    %344 = vmatpush1.bf16.msra.mxu0 %v232
    %345 = vmatprep.subr.bf16.mxu0 %v229
    %346 = vmatpush1.bf16.msra.mxu0 %v228
    %347 = vmatprep.subr.bf16.mxu0 0
    %348 = vmatpush2.bf16.msra.mxu0 0
    %349 = vmatprep.subr.bf16.mxu0 0
    %350 = vmatpush2.bf16.msra.mxu0 0
    %351 = vmatprep.subr.bf16.mxu0 0
    %352 = vmatpush2.bf16.msra.mxu0 0
    %353 = vmatprep.subr.bf16.mxu0 0
    %354 = vmatpush2.bf16.msra.mxu0 0
    %355 = vmatprep.subr.bf16.mxu0 0
    %356 = vmatpush2.bf16.msra.mxu0 0
    %357 = vmatprep.subr.bf16.mxu0 0
    %358 = vmatpush2.bf16.msra.mxu0 0
    %359 = vmatprep.subr.bf16.mxu0 0
    %360 = vmatpush2.bf16.msra.mxu0 0
    %361 = vmatprep.subr.bf16.mxu0 0
    %362 = vmatpush2.bf16.msra.mxu0 0
    %363 = vmatprep.mubr.bf16.mxu0 0
    %364 = vmatmul.mubr.bf16.gmra.mxu0 %v129
    %v365 = vpop.f32.mrf.mxu0
    %v366 = vadd.f32 0.0, %v365
    %v367 = vpop.f32.mrf.mxu0
    %v368 = vadd.f32 0.0, %v367
    %v369 = vpop.f32.mrf.mxu0
    %v370 = vpop.f32.mrf.mxu0
    %371 = vdwg.mxu0
    %v376 = vunpack.c.l.b16 %v88
    %v377 = vunpack.c.h.b16 %v88
    %v378 = vunpack.c.l.b16 %v89
    %v379 = vunpack.c.h.b16 %v89
    %v380 = vunpack.c.l.b16 %v90
    %v381 = vunpack.c.h.b16 %v90
    %v382 = vunpack.c.l.b16 %v91
    %v383 = vunpack.c.h.b16 %v91
    %v384 = vpack.c.b16 %v380, %v376
    %v385 = vpack.c.b16 %v381, %v377
    %v386 = vpack.c.b16 %v382, %v378
    %v387 = vpack.c.b16 %v383, %v379
    %vm392 = vcmask 130048
    %v394 = vsel %vm392, %v128, 0
    %396 = vmatprep.subr.bf16.mxu0 0
    %397 = vmatpush1.bf16.msra.mxu0 0
    %398 = vmatprep.subr.bf16.mxu0 0
    %399 = vmatpush1.bf16.msra.mxu0 0
    %400 = vmatprep.subr.bf16.mxu0 0
    %401 = vmatpush1.bf16.msra.mxu0 0
    %402 = vmatprep.subr.bf16.mxu0 0
    %403 = vmatpush1.bf16.msra.mxu0 0
    %404 = vmatprep.subr.bf16.mxu0 0
    %405 = vmatpush1.bf16.msra.mxu0 0
    %406 = vmatprep.subr.bf16.mxu0 0
    %407 = vmatpush1.bf16.msra.mxu0 0
    %408 = vmatprep.subr.bf16.mxu0 0
    %409 = vmatpush1.bf16.msra.mxu0 0
    %410 = vmatprep.subr.bf16.mxu0 %v385
    %411 = vmatpush1.bf16.msra.mxu0 %v384
    %412 = vmatprep.subr.bf16.mxu0 0
    %413 = vmatpush2.bf16.msra.mxu0 0
    %414 = vmatprep.subr.bf16.mxu0 0
    %415 = vmatpush2.bf16.msra.mxu0 0
    %416 = vmatprep.subr.bf16.mxu0 0
    %417 = vmatpush2.bf16.msra.mxu0 0
    %418 = vmatprep.subr.bf16.mxu0 0
    %419 = vmatpush2.bf16.msra.mxu0 0
    %420 = vmatprep.subr.bf16.mxu0 0
    %421 = vmatpush2.bf16.msra.mxu0 0
    %422 = vmatprep.subr.bf16.mxu0 0
    %423 = vmatpush2.bf16.msra.mxu0 0
    %424 = vmatprep.subr.bf16.mxu0 0
    %425 = vmatpush2.bf16.msra.mxu0 0
    %426 = vmatprep.subr.bf16.mxu0 0
    %427 = vmatpush2.bf16.msra.mxu0 0
    %428 = vmatprep.mubr.bf16.mxu0 0
    %429 = vmatmul.mubr.bf16.gmra.mxu0 %v394
    %v430 = vpop.f32.mrf.mxu0
    %v431 = vadd.f32 %v325, %v430
    %v432 = vpop.f32.mrf.mxu0
    %v433 = vadd.f32 %v327, %v432
    %v434 = vpop.f32.mrf.mxu0
    %v435 = vpop.f32.mrf.mxu0
    %436 = vdwg.mxu0
    %437 = vmatprep.subr.bf16.mxu0 0
    %438 = vmatpush1.bf16.msra.mxu0 0
    %439 = vmatprep.subr.bf16.mxu0 0
    %440 = vmatpush1.bf16.msra.mxu0 0
    %441 = vmatprep.subr.bf16.mxu0 0
    %442 = vmatpush1.bf16.msra.mxu0 0
    %443 = vmatprep.subr.bf16.mxu0 0
    %444 = vmatpush1.bf16.msra.mxu0 0
    %445 = vmatprep.subr.bf16.mxu0 0
    %446 = vmatpush1.bf16.msra.mxu0 0
    %447 = vmatprep.subr.bf16.mxu0 0
    %448 = vmatpush1.bf16.msra.mxu0 0
    %449 = vmatprep.subr.bf16.mxu0 0
    %450 = vmatpush1.bf16.msra.mxu0 0
    %451 = vmatprep.subr.bf16.mxu0 %v387
    %452 = vmatpush1.bf16.msra.mxu0 %v386
    %453 = vmatprep.subr.bf16.mxu0 0
    %454 = vmatpush2.bf16.msra.mxu0 0
    %455 = vmatprep.subr.bf16.mxu0 0
    %456 = vmatpush2.bf16.msra.mxu0 0
    %457 = vmatprep.subr.bf16.mxu0 0
    %458 = vmatpush2.bf16.msra.mxu0 0
    %459 = vmatprep.subr.bf16.mxu0 0
    %460 = vmatpush2.bf16.msra.mxu0 0
    %461 = vmatprep.subr.bf16.mxu0 0
    %462 = vmatpush2.bf16.msra.mxu0 0
    %463 = vmatprep.subr.bf16.mxu0 0
    %464 = vmatpush2.bf16.msra.mxu0 0
    %465 = vmatprep.subr.bf16.mxu0 0
    %466 = vmatpush2.bf16.msra.mxu0 0
    %467 = vmatprep.subr.bf16.mxu0 0
    %468 = vmatpush2.bf16.msra.mxu0 0
    %469 = vmatprep.mubr.bf16.mxu0 0
    %470 = vmatmul.mubr.bf16.gmra.mxu0 %v394
    %v471 = vpop.f32.mrf.mxu0
    %v472 = vadd.f32 %v366, %v471
    %v473 = vpop.f32.mrf.mxu0
    %v474 = vadd.f32 %v368, %v473
    %v475 = vpop.f32.mrf.mxu0
    %v476 = vpop.f32.mrf.mxu0
    %477 = vdwg.mxu0
    %v479 = vlaneseq
    %v480 = vshrl.u32 %v479, 7
    %v481 = vsub.s32 0, %v480
    %v482 = vrot.slane %v124, %v481
    %v483 = vlaneseq
    %v484 = vshrl.u32 %v483, 7
    %v485 = vsub.s32 1, %v484
    %v486 = vrot.slane %v124, %v485
    %v487 = vlaneseq
    %v488 = vshrl.u32 %v487, 7
    %v489 = vsub.s32 2, %v488
    %v490 = vrot.slane %v124, %v489
    %v491 = vlaneseq
    %v492 = vshrl.u32 %v491, 7
    %v493 = vsub.s32 3, %v492
    %v494 = vrot.slane %v124, %v493
    %v499 = vadd.f32 %v431, %v482
    %v500 = vadd.f32 %v433, %v486
    %v501 = vadd.f32 %v472, %v490
    %v502 = vadd.f32 %v474, %v494
    %v503 = vxor.u32 %v499, 2147483648
    %v504 = vmul.f32 %v503, 1.442695
    %v505 = vpow.pop %v504
    %v506 = vadd.f32 %v505, 1.0
    %v507 = vrcp.pop %v506
    %v508 = vmul.f32 1.0, %v507
    %v509 = vxor.u32 %v500, 2147483648
    %v510 = vmul.f32 %v509, 1.442695
    %v511 = vpow.pop %v510
    %v512 = vadd.f32 %v511, 1.0
    %v513 = vrcp.pop %v512
    %v514 = vmul.f32 1.0, %v513
    %v515 = vtanh.pop %v501
    %v516 = vxor.u32 %v502, 2147483648
    %v517 = vmul.f32 %v516, 1.442695
    %v518 = vpow.pop %v517
    %v519 = vadd.f32 %v518, 1.0
    %v520 = vrcp.pop %v519
    %v521 = vmul.f32 1.0, %v520
    %v522 = vmul.f32 %v514, %v126
    %v523 = vmul.f32 %v508, %v515
    %v524 = vadd.f32 %v522, %v523
    %v525 = vtanh.pop %v524
    %v526 = vmul.f32 %v521, %v525
    %527 = vst [vmem:[#allocation2] sm:$0x3] %v526
    %s528 = scalar_lea.vmem [#allocation4], 2
    %v529 = vld [vmem:[%s528] sm:$0x3]
    %v530 = vpack.c.bf16 %v529, %v529
    %v531 = vpack.c.bf16 %v526, %v526
    %532 = vmatprep.subr.bf16.mxu0 %v255
    %533 = vmatpush1.bf16.msra.mxu0 %v254
    %534 = vmatprep.subr.bf16.mxu0 %v251
    %535 = vmatpush1.bf16.msra.mxu0 %v250
    %536 = vmatprep.subr.bf16.mxu0 %v247
    %537 = vmatpush1.bf16.msra.mxu0 %v246
    %538 = vmatprep.subr.bf16.mxu0 %v243
    %539 = vmatpush1.bf16.msra.mxu0 %v242
    %540 = vmatprep.subr.bf16.mxu0 %v239
    %541 = vmatpush1.bf16.msra.mxu0 %v238
    %542 = vmatprep.subr.bf16.mxu0 %v235
    %543 = vmatpush1.bf16.msra.mxu0 %v234
    %544 = vmatprep.subr.bf16.mxu0 %v231
    %545 = vmatpush1.bf16.msra.mxu0 %v230
    %546 = vmatprep.subr.bf16.mxu0 %v227
    %547 = vmatpush1.bf16.msra.mxu0 %v226
    %548 = vmatprep.subr.bf16.mxu0 0
    %549 = vmatpush2.bf16.msra.mxu0 0
    %550 = vmatprep.subr.bf16.mxu0 0
    %551 = vmatpush2.bf16.msra.mxu0 0
    %552 = vmatprep.subr.bf16.mxu0 0
    %553 = vmatpush2.bf16.msra.mxu0 0
    %554 = vmatprep.subr.bf16.mxu0 0
    %555 = vmatpush2.bf16.msra.mxu0 0
    %556 = vmatprep.subr.bf16.mxu0 0
    %557 = vmatpush2.bf16.msra.mxu0 0
    %558 = vmatprep.subr.bf16.mxu0 0
    %559 = vmatpush2.bf16.msra.mxu0 0
    %560 = vmatprep.subr.bf16.mxu0 0
    %561 = vmatpush2.bf16.msra.mxu0 0
    %562 = vmatprep.subr.bf16.mxu0 0
    %563 = vmatpush2.bf16.msra.mxu0 0
    %564 = vmatprep.mubr.bf16.mxu0 0
    %565 = vmatmul.mubr.bf16.gmra.mxu0 %v531
    %v566 = vpop.f32.mrf.mxu0
    %v567 = vadd.f32 0.0, %v566
    %v568 = vpop.f32.mrf.mxu0
    %v569 = vadd.f32 0.0, %v568
    %v570 = vpop.f32.mrf.mxu0
    %v571 = vpop.f32.mrf.mxu0
    %572 = vdwg.mxu0
    %573 = vmatprep.subr.bf16.mxu0 %v257
    %574 = vmatpush1.bf16.msra.mxu0 %v256
    %575 = vmatprep.subr.bf16.mxu0 %v253
    %576 = vmatpush1.bf16.msra.mxu0 %v252
    %577 = vmatprep.subr.bf16.mxu0 %v249
    %578 = vmatpush1.bf16.msra.mxu0 %v248
    %579 = vmatprep.subr.bf16.mxu0 %v245
    %580 = vmatpush1.bf16.msra.mxu0 %v244
    %581 = vmatprep.subr.bf16.mxu0 %v241
    %582 = vmatpush1.bf16.msra.mxu0 %v240
    %583 = vmatprep.subr.bf16.mxu0 %v237
    %584 = vmatpush1.bf16.msra.mxu0 %v236
    %585 = vmatprep.subr.bf16.mxu0 %v233
    %586 = vmatpush1.bf16.msra.mxu0 %v232
    %587 = vmatprep.subr.bf16.mxu0 %v229
    %588 = vmatpush1.bf16.msra.mxu0 %v228
    %589 = vmatprep.subr.bf16.mxu0 0
    %590 = vmatpush2.bf16.msra.mxu0 0
    %591 = vmatprep.subr.bf16.mxu0 0
    %592 = vmatpush2.bf16.msra.mxu0 0
    %593 = vmatprep.subr.bf16.mxu0 0
    %594 = vmatpush2.bf16.msra.mxu0 0
    %595 = vmatprep.subr.bf16.mxu0 0
    %596 = vmatpush2.bf16.msra.mxu0 0
    %597 = vmatprep.subr.bf16.mxu0 0
    %598 = vmatpush2.bf16.msra.mxu0 0
    %599 = vmatprep.subr.bf16.mxu0 0
    %600 = vmatpush2.bf16.msra.mxu0 0
    %601 = vmatprep.subr.bf16.mxu0 0
    %602 = vmatpush2.bf16.msra.mxu0 0
    %603 = vmatprep.subr.bf16.mxu0 0
    %604 = vmatpush2.bf16.msra.mxu0 0
    %605 = vmatprep.mubr.bf16.mxu0 0
    %606 = vmatmul.mubr.bf16.gmra.mxu0 %v531
    %v607 = vpop.f32.mrf.mxu0
    %v608 = vadd.f32 0.0, %v607
    %v609 = vpop.f32.mrf.mxu0
    %v610 = vadd.f32 0.0, %v609
    %v611 = vpop.f32.mrf.mxu0
    %v612 = vpop.f32.mrf.mxu0
    %613 = vdwg.mxu0
    %v615 = vsel %vm392, %v530, 0
    %617 = vmatprep.subr.bf16.mxu0 0
    %618 = vmatpush1.bf16.msra.mxu0 0
    %619 = vmatprep.subr.bf16.mxu0 0
    %620 = vmatpush1.bf16.msra.mxu0 0
    %621 = vmatprep.subr.bf16.mxu0 0
    %622 = vmatpush1.bf16.msra.mxu0 0
    %623 = vmatprep.subr.bf16.mxu0 0
    %624 = vmatpush1.bf16.msra.mxu0 0
    %625 = vmatprep.subr.bf16.mxu0 0
    %626 = vmatpush1.bf16.msra.mxu0 0
    %627 = vmatprep.subr.bf16.mxu0 0
    %628 = vmatpush1.bf16.msra.mxu0 0
    %629 = vmatprep.subr.bf16.mxu0 0
    %630 = vmatpush1.bf16.msra.mxu0 0
    %631 = vmatprep.subr.bf16.mxu0 %v385
    %632 = vmatpush1.bf16.msra.mxu0 %v384
    %633 = vmatprep.subr.bf16.mxu0 0
    %634 = vmatpush2.bf16.msra.mxu0 0
    %635 = vmatprep.subr.bf16.mxu0 0
    %636 = vmatpush2.bf16.msra.mxu0 0
    %637 = vmatprep.subr.bf16.mxu0 0
    %638 = vmatpush2.bf16.msra.mxu0 0
    %639 = vmatprep.subr.bf16.mxu0 0
    %640 = vmatpush2.bf16.msra.mxu0 0
    %641 = vmatprep.subr.bf16.mxu0 0
    %642 = vmatpush2.bf16.msra.mxu0 0
    %643 = vmatprep.subr.bf16.mxu0 0
    %644 = vmatpush2.bf16.msra.mxu0 0
    %645 = vmatprep.subr.bf16.mxu0 0
    %646 = vmatpush2.bf16.msra.mxu0 0
    %647 = vmatprep.subr.bf16.mxu0 0
    %648 = vmatpush2.bf16.msra.mxu0 0
    %649 = vmatprep.mubr.bf16.mxu0 0
    %650 = vmatmul.mubr.bf16.gmra.mxu0 %v615
    %v651 = vpop.f32.mrf.mxu0
    %v652 = vadd.f32 %v567, %v651
    %v653 = vpop.f32.mrf.mxu0
    %v654 = vadd.f32 %v569, %v653
    %v655 = vpop.f32.mrf.mxu0
    %v656 = vpop.f32.mrf.mxu0
    %657 = vdwg.mxu0
    %658 = vmatprep.subr.bf16.mxu0 0
    %659 = vmatpush1.bf16.msra.mxu0 0
    %660 = vmatprep.subr.bf16.mxu0 0
    %661 = vmatpush1.bf16.msra.mxu0 0
    %662 = vmatprep.subr.bf16.mxu0 0
    %663 = vmatpush1.bf16.msra.mxu0 0
    %664 = vmatprep.subr.bf16.mxu0 0
    %665 = vmatpush1.bf16.msra.mxu0 0
    %666 = vmatprep.subr.bf16.mxu0 0
    %667 = vmatpush1.bf16.msra.mxu0 0
    %668 = vmatprep.subr.bf16.mxu0 0
    %669 = vmatpush1.bf16.msra.mxu0 0
    %670 = vmatprep.subr.bf16.mxu0 0
    %671 = vmatpush1.bf16.msra.mxu0 0
    %672 = vmatprep.subr.bf16.mxu0 %v387
    %673 = vmatpush1.bf16.msra.mxu0 %v386
    %674 = vmatprep.subr.bf16.mxu0 0
    %675 = vmatpush2.bf16.msra.mxu0 0
    %676 = vmatprep.subr.bf16.mxu0 0
    %677 = vmatpush2.bf16.msra.mxu0 0
    %678 = vmatprep.subr.bf16.mxu0 0
    %679 = vmatpush2.bf16.msra.mxu0 0
    %680 = vmatprep.subr.bf16.mxu0 0
    %681 = vmatpush2.bf16.msra.mxu0 0
    %682 = vmatprep.subr.bf16.mxu0 0
    %683 = vmatpush2.bf16.msra.mxu0 0
    %684 = vmatprep.subr.bf16.mxu0 0
    %685 = vmatpush2.bf16.msra.mxu0 0
    %686 = vmatprep.subr.bf16.mxu0 0
    %687 = vmatpush2.bf16.msra.mxu0 0
    %688 = vmatprep.subr.bf16.mxu0 0
    %689 = vmatpush2.bf16.msra.mxu0 0
    %690 = vmatprep.mubr.bf16.mxu0 0
    %691 = vmatmul.mubr.bf16.gmra.mxu0 %v615
    %v692 = vpop.f32.mrf.mxu0
    %v693 = vadd.f32 %v608, %v692
    %v694 = vpop.f32.mrf.mxu0
    %v695 = vadd.f32 %v610, %v694
    %v696 = vpop.f32.mrf.mxu0
    %v697 = vpop.f32.mrf.mxu0
    %698 = vdwg.mxu0
    %v699 = vadd.f32 %v652, %v482
    %v700 = vadd.f32 %v654, %v486
    %v701 = vadd.f32 %v693, %v490
    %v702 = vadd.f32 %v695, %v494
    %v703 = vxor.u32 %v699, 2147483648
    %v704 = vmul.f32 %v703, 1.442695
    %v705 = vpow.pop %v704
    %v706 = vadd.f32 %v705, 1.0
    %v707 = vrcp.pop %v706
    %v708 = vmul.f32 1.0, %v707
    %v709 = vxor.u32 %v700, 2147483648
    %v710 = vmul.f32 %v709, 1.442695
    %v711 = vpow.pop %v710
    %v712 = vadd.f32 %v711, 1.0
    %v713 = vrcp.pop %v712
    %v714 = vmul.f32 1.0, %v713
    %v715 = vtanh.pop %v701
    %v716 = vxor.u32 %v702, 2147483648
    %v717 = vmul.f32 %v716, 1.442695
    %v718 = vpow.pop %v717
    %v719 = vadd.f32 %v718, 1.0
    %v720 = vrcp.pop %v719
    %v721 = vmul.f32 1.0, %v720
    %v722 = vmul.f32 %v714, %v524
    %v723 = vmul.f32 %v708, %v715
    %v724 = vadd.f32 %v722, %v723
    %v725 = vtanh.pop %v724
    %v726 = vmul.f32 %v721, %v725
    %s727 = scalar_lea.vmem [#allocation2], 2
    %728 = vst [vmem:[%s727] sm:$0x3] %v726
    %s729 = scalar_lea.vmem [#allocation4], 4
    %v730 = vld [vmem:[%s729] sm:$0x3]
    %v731 = vpack.c.bf16 %v730, %v730
    %v732 = vpack.c.bf16 %v726, %v726
    %733 = vmatprep.subr.bf16.mxu0 %v255
    %734 = vmatpush1.bf16.msra.mxu0 %v254
    %735 = vmatprep.subr.bf16.mxu0 %v251
    %736 = vmatpush1.bf16.msra.mxu0 %v250
    %737 = vmatprep.subr.bf16.mxu0 %v247
    %738 = vmatpush1.bf16.msra.mxu0 %v246
    %739 = vmatprep.subr.bf16.mxu0 %v243
    %740 = vmatpush1.bf16.msra.mxu0 %v242
    %741 = vmatprep.subr.bf16.mxu0 %v239
    %742 = vmatpush1.bf16.msra.mxu0 %v238
    %743 = vmatprep.subr.bf16.mxu0 %v235
    %744 = vmatpush1.bf16.msra.mxu0 %v234
    %745 = vmatprep.subr.bf16.mxu0 %v231
    %746 = vmatpush1.bf16.msra.mxu0 %v230
    %747 = vmatprep.subr.bf16.mxu0 %v227
    %748 = vmatpush1.bf16.msra.mxu0 %v226
    %749 = vmatprep.subr.bf16.mxu0 0
    %750 = vmatpush2.bf16.msra.mxu0 0
    %751 = vmatprep.subr.bf16.mxu0 0
    %752 = vmatpush2.bf16.msra.mxu0 0
    %753 = vmatprep.subr.bf16.mxu0 0
    %754 = vmatpush2.bf16.msra.mxu0 0
    %755 = vmatprep.subr.bf16.mxu0 0
    %756 = vmatpush2.bf16.msra.mxu0 0
    %757 = vmatprep.subr.bf16.mxu0 0
    %758 = vmatpush2.bf16.msra.mxu0 0
    %759 = vmatprep.subr.bf16.mxu0 0
    %760 = vmatpush2.bf16.msra.mxu0 0
    %761 = vmatprep.subr.bf16.mxu0 0
    %762 = vmatpush2.bf16.msra.mxu0 0
    %763 = vmatprep.subr.bf16.mxu0 0
    %764 = vmatpush2.bf16.msra.mxu0 0
    %765 = vmatprep.mubr.bf16.mxu0 0
    %766 = vmatmul.mubr.bf16.gmra.mxu0 %v732
    %v767 = vpop.f32.mrf.mxu0
    %v768 = vadd.f32 0.0, %v767
    %v769 = vpop.f32.mrf.mxu0
    %v770 = vadd.f32 0.0, %v769
    %v771 = vpop.f32.mrf.mxu0
    %v772 = vpop.f32.mrf.mxu0
    %773 = vdwg.mxu0
    %774 = vmatprep.subr.bf16.mxu0 %v257
    %775 = vmatpush1.bf16.msra.mxu0 %v256
    %776 = vmatprep.subr.bf16.mxu0 %v253
    %777 = vmatpush1.bf16.msra.mxu0 %v252
    %778 = vmatprep.subr.bf16.mxu0 %v249
    %779 = vmatpush1.bf16.msra.mxu0 %v248
    %780 = vmatprep.subr.bf16.mxu0 %v245
    %781 = vmatpush1.bf16.msra.mxu0 %v244
    %782 = vmatprep.subr.bf16.mxu0 %v241
    %783 = vmatpush1.bf16.msra.mxu0 %v240
    %784 = vmatprep.subr.bf16.mxu0 %v237
    %785 = vmatpush1.bf16.msra.mxu0 %v236
    %786 = vmatprep.subr.bf16.mxu0 %v233
    %787 = vmatpush1.bf16.msra.mxu0 %v232
    %788 = vmatprep.subr.bf16.mxu0 %v229
    %789 = vmatpush1.bf16.msra.mxu0 %v228
    %790 = vmatprep.subr.bf16.mxu0 0
    %791 = vmatpush2.bf16.msra.mxu0 0
    %792 = vmatprep.subr.bf16.mxu0 0
    %793 = vmatpush2.bf16.msra.mxu0 0
    %794 = vmatprep.subr.bf16.mxu0 0
    %795 = vmatpush2.bf16.msra.mxu0 0
    %796 = vmatprep.subr.bf16.mxu0 0
    %797 = vmatpush2.bf16.msra.mxu0 0
    %798 = vmatprep.subr.bf16.mxu0 0
    %799 = vmatpush2.bf16.msra.mxu0 0
    %800 = vmatprep.subr.bf16.mxu0 0
    %801 = vmatpush2.bf16.msra.mxu0 0
    %802 = vmatprep.subr.bf16.mxu0 0
    %803 = vmatpush2.bf16.msra.mxu0 0
    %804 = vmatprep.subr.bf16.mxu0 0
    %805 = vmatpush2.bf16.msra.mxu0 0
    %806 = vmatprep.mubr.bf16.mxu0 0
    %807 = vmatmul.mubr.bf16.gmra.mxu0 %v732
    %v808 = vpop.f32.mrf.mxu0
    %v809 = vadd.f32 0.0, %v808
    %v810 = vpop.f32.mrf.mxu0
    %v811 = vadd.f32 0.0, %v810
    %v812 = vpop.f32.mrf.mxu0
    %v813 = vpop.f32.mrf.mxu0
    %814 = vdwg.mxu0
    %v816 = vsel %vm392, %v731, 0
    %818 = vmatprep.subr.bf16.mxu0 0
    %819 = vmatpush1.bf16.msra.mxu0 0
    %820 = vmatprep.subr.bf16.mxu0 0
    %821 = vmatpush1.bf16.msra.mxu0 0
    %822 = vmatprep.subr.bf16.mxu0 0
    %823 = vmatpush1.bf16.msra.mxu0 0
    %824 = vmatprep.subr.bf16.mxu0 0
    %825 = vmatpush1.bf16.msra.mxu0 0
    %826 = vmatprep.subr.bf16.mxu0 0
    %827 = vmatpush1.bf16.msra.mxu0 0
    %828 = vmatprep.subr.bf16.mxu0 0
    %829 = vmatpush1.bf16.msra.mxu0 0
    %830 = vmatprep.subr.bf16.mxu0 0
    %831 = vmatpush1.bf16.msra.mxu0 0
    %832 = vmatprep.subr.bf16.mxu0 %v385
    %833 = vmatpush1.bf16.msra.mxu0 %v384
    %834 = vmatprep.subr.bf16.mxu0 0
    %835 = vmatpush2.bf16.msra.mxu0 0
    %836 = vmatprep.subr.bf16.mxu0 0
    %837 = vmatpush2.bf16.msra.mxu0 0
    %838 = vmatprep.subr.bf16.mxu0 0
    %839 = vmatpush2.bf16.msra.mxu0 0
    %840 = vmatprep.subr.bf16.mxu0 0
    %841 = vmatpush2.bf16.msra.mxu0 0
    %842 = vmatprep.subr.bf16.mxu0 0
    %843 = vmatpush2.bf16.msra.mxu0 0
    %844 = vmatprep.subr.bf16.mxu0 0
    %845 = vmatpush2.bf16.msra.mxu0 0
    %846 = vmatprep.subr.bf16.mxu0 0
    %847 = vmatpush2.bf16.msra.mxu0 0
    %848 = vmatprep.subr.bf16.mxu0 0
    %849 = vmatpush2.bf16.msra.mxu0 0
    %850 = vmatprep.mubr.bf16.mxu0 0
    %851 = vmatmul.mubr.bf16.gmra.mxu0 %v816
    %v852 = vpop.f32.mrf.mxu0
    %v853 = vadd.f32 %v768, %v852
    %v854 = vpop.f32.mrf.mxu0
    %v855 = vadd.f32 %v770, %v854
    %v856 = vpop.f32.mrf.mxu0
    %v857 = vpop.f32.mrf.mxu0
    %858 = vdwg.mxu0
    %859 = vmatprep.subr.bf16.mxu0 0
    %860 = vmatpush1.bf16.msra.mxu0 0
    %861 = vmatprep.subr.bf16.mxu0 0
    %862 = vmatpush1.bf16.msra.mxu0 0
    %863 = vmatprep.subr.bf16.mxu0 0
    %864 = vmatpush1.bf16.msra.mxu0 0
    %865 = vmatprep.subr.bf16.mxu0 0
    %866 = vmatpush1.bf16.msra.mxu0 0
    %867 = vmatprep.subr.bf16.mxu0 0
    %868 = vmatpush1.bf16.msra.mxu0 0
    %869 = vmatprep.subr.bf16.mxu0 0
    %870 = vmatpush1.bf16.msra.mxu0 0
    %871 = vmatprep.subr.bf16.mxu0 0
    %872 = vmatpush1.bf16.msra.mxu0 0
    %873 = vmatprep.subr.bf16.mxu0 %v387
    %874 = vmatpush1.bf16.msra.mxu0 %v386
    %875 = vmatprep.subr.bf16.mxu0 0
    %876 = vmatpush2.bf16.msra.mxu0 0
    %877 = vmatprep.subr.bf16.mxu0 0
    %878 = vmatpush2.bf16.msra.mxu0 0
    %879 = vmatprep.subr.bf16.mxu0 0
    %880 = vmatpush2.bf16.msra.mxu0 0
    %881 = vmatprep.subr.bf16.mxu0 0
    %882 = vmatpush2.bf16.msra.mxu0 0
    %883 = vmatprep.subr.bf16.mxu0 0
    %884 = vmatpush2.bf16.msra.mxu0 0
    %885 = vmatprep.subr.bf16.mxu0 0
    %886 = vmatpush2.bf16.msra.mxu0 0
    %887 = vmatprep.subr.bf16.mxu0 0
    %888 = vmatpush2.bf16.msra.mxu0 0
    %889 = vmatprep.subr.bf16.mxu0 0
    %890 = vmatpush2.bf16.msra.mxu0 0
    %891 = vmatprep.mubr.bf16.mxu0 0
    %892 = vmatmul.mubr.bf16.gmra.mxu0 %v816
    %v893 = vpop.f32.mrf.mxu0
    %v894 = vadd.f32 %v809, %v893
    %v895 = vpop.f32.mrf.mxu0
    %v896 = vadd.f32 %v811, %v895
    %v897 = vpop.f32.mrf.mxu0
    %v898 = vpop.f32.mrf.mxu0
    %899 = vdwg.mxu0
    %v900 = vadd.f32 %v853, %v482
    %v901 = vadd.f32 %v855, %v486
    %v902 = vadd.f32 %v894, %v490
    %v903 = vadd.f32 %v896, %v494
    %v904 = vxor.u32 %v900, 2147483648
    %v905 = vmul.f32 %v904, 1.442695
    %v906 = vpow.pop %v905
    %v907 = vadd.f32 %v906, 1.0
    %v908 = vrcp.pop %v907
    %v909 = vmul.f32 1.0, %v908
    %v910 = vxor.u32 %v901, 2147483648
    %v911 = vmul.f32 %v910, 1.442695
    %v912 = vpow.pop %v911
    %v913 = vadd.f32 %v912, 1.0
    %v914 = vrcp.pop %v913
    %v915 = vmul.f32 1.0, %v914
    %v916 = vtanh.pop %v902
    %v917 = vxor.u32 %v903, 2147483648
    %v918 = vmul.f32 %v917, 1.442695
    %v919 = vpow.pop %v918
    %v920 = vadd.f32 %v919, 1.0
    %v921 = vrcp.pop %v920
    %v922 = vmul.f32 1.0, %v921
    %v923 = vmul.f32 %v915, %v724
    %v924 = vmul.f32 %v909, %v916
    %v925 = vadd.f32 %v923, %v924
    %v926 = vtanh.pop %v925
    %v927 = vmul.f32 %v922, %v926
    %s928 = scalar_lea.vmem [#allocation2], 4
    %929 = vst [vmem:[%s928] sm:$0x3] %v927
    %s930 = scalar_lea.vmem [#allocation4], 6
    %v931 = vld [vmem:[%s930] sm:$0x3]
    %v932 = vpack.c.bf16 %v931, %v931
    %v933 = vpack.c.bf16 %v927, %v927
    %934 = vmatprep.subr.bf16.mxu0 %v255
    %935 = vmatpush1.bf16.msra.mxu0 %v254
    %936 = vmatprep.subr.bf16.mxu0 %v251
    %937 = vmatpush1.bf16.msra.mxu0 %v250
    %938 = vmatprep.subr.bf16.mxu0 %v247
    %939 = vmatpush1.bf16.msra.mxu0 %v246
    %940 = vmatprep.subr.bf16.mxu0 %v243
    %941 = vmatpush1.bf16.msra.mxu0 %v242
    %942 = vmatprep.subr.bf16.mxu0 %v239
    %943 = vmatpush1.bf16.msra.mxu0 %v238
    %944 = vmatprep.subr.bf16.mxu0 %v235
    %945 = vmatpush1.bf16.msra.mxu0 %v234
    %946 = vmatprep.subr.bf16.mxu0 %v231
    %947 = vmatpush1.bf16.msra.mxu0 %v230
    %948 = vmatprep.subr.bf16.mxu0 %v227
    %949 = vmatpush1.bf16.msra.mxu0 %v226
    %950 = vmatprep.subr.bf16.mxu0 0
    %951 = vmatpush2.bf16.msra.mxu0 0
    %952 = vmatprep.subr.bf16.mxu0 0
    %953 = vmatpush2.bf16.msra.mxu0 0
    %954 = vmatprep.subr.bf16.mxu0 0
    %955 = vmatpush2.bf16.msra.mxu0 0
    %956 = vmatprep.subr.bf16.mxu0 0
    %957 = vmatpush2.bf16.msra.mxu0 0
    %958 = vmatprep.subr.bf16.mxu0 0
    %959 = vmatpush2.bf16.msra.mxu0 0
    %960 = vmatprep.subr.bf16.mxu0 0
    %961 = vmatpush2.bf16.msra.mxu0 0
    %962 = vmatprep.subr.bf16.mxu0 0
    %963 = vmatpush2.bf16.msra.mxu0 0
    %964 = vmatprep.subr.bf16.mxu0 0
    %965 = vmatpush2.bf16.msra.mxu0 0
    %966 = vmatprep.mubr.bf16.mxu0 0
    %967 = vmatmul.mubr.bf16.gmra.mxu0 %v933
    %v968 = vpop.f32.mrf.mxu0
    %v969 = vadd.f32 0.0, %v968
    %v970 = vpop.f32.mrf.mxu0
    %v971 = vadd.f32 0.0, %v970
    %v972 = vpop.f32.mrf.mxu0
    %v973 = vpop.f32.mrf.mxu0
    %974 = vdwg.mxu0
    %975 = vmatprep.subr.bf16.mxu0 %v257
    %976 = vmatpush1.bf16.msra.mxu0 %v256
    %977 = vmatprep.subr.bf16.mxu0 %v253
    %978 = vmatpush1.bf16.msra.mxu0 %v252
    %979 = vmatprep.subr.bf16.mxu0 %v249
    %980 = vmatpush1.bf16.msra.mxu0 %v248
    %981 = vmatprep.subr.bf16.mxu0 %v245
    %982 = vmatpush1.bf16.msra.mxu0 %v244
    %983 = vmatprep.subr.bf16.mxu0 %v241
    %984 = vmatpush1.bf16.msra.mxu0 %v240
    %985 = vmatprep.subr.bf16.mxu0 %v237
    %986 = vmatpush1.bf16.msra.mxu0 %v236
    %987 = vmatprep.subr.bf16.mxu0 %v233
    %988 = vmatpush1.bf16.msra.mxu0 %v232
    %989 = vmatprep.subr.bf16.mxu0 %v229
    %990 = vmatpush1.bf16.msra.mxu0 %v228
    %991 = vmatprep.subr.bf16.mxu0 0
    %992 = vmatpush2.bf16.msra.mxu0 0
    %993 = vmatprep.subr.bf16.mxu0 0
    %994 = vmatpush2.bf16.msra.mxu0 0
    %995 = vmatprep.subr.bf16.mxu0 0
    %996 = vmatpush2.bf16.msra.mxu0 0
    %997 = vmatprep.subr.bf16.mxu0 0
    %998 = vmatpush2.bf16.msra.mxu0 0
    %999 = vmatprep.subr.bf16.mxu0 0
    %1000 = vmatpush2.bf16.msra.mxu0 0
    %1001 = vmatprep.subr.bf16.mxu0 0
    %1002 = vmatpush2.bf16.msra.mxu0 0
    %1003 = vmatprep.subr.bf16.mxu0 0
    %1004 = vmatpush2.bf16.msra.mxu0 0
    %1005 = vmatprep.subr.bf16.mxu0 0
    %1006 = vmatpush2.bf16.msra.mxu0 0
    %1007 = vmatprep.mubr.bf16.mxu0 0
    %1008 = vmatmul.mubr.bf16.gmra.mxu0 %v933
    %v1009 = vpop.f32.mrf.mxu0
    %v1010 = vadd.f32 0.0, %v1009
    %v1011 = vpop.f32.mrf.mxu0
    %v1012 = vadd.f32 0.0, %v1011
    %v1013 = vpop.f32.mrf.mxu0
    %v1014 = vpop.f32.mrf.mxu0
    %1015 = vdwg.mxu0
    %v1017 = vsel %vm392, %v932, 0
    %1019 = vmatprep.subr.bf16.mxu0 0
    %1020 = vmatpush1.bf16.msra.mxu0 0
    %1021 = vmatprep.subr.bf16.mxu0 0
    %1022 = vmatpush1.bf16.msra.mxu0 0
    %1023 = vmatprep.subr.bf16.mxu0 0
    %1024 = vmatpush1.bf16.msra.mxu0 0
    %1025 = vmatprep.subr.bf16.mxu0 0
    %1026 = vmatpush1.bf16.msra.mxu0 0
    %1027 = vmatprep.subr.bf16.mxu0 0
    %1028 = vmatpush1.bf16.msra.mxu0 0
    %1029 = vmatprep.subr.bf16.mxu0 0
    %1030 = vmatpush1.bf16.msra.mxu0 0
    %1031 = vmatprep.subr.bf16.mxu0 0
    %1032 = vmatpush1.bf16.msra.mxu0 0
    %1033 = vmatprep.subr.bf16.mxu0 %v385
    %1034 = vmatpush1.bf16.msra.mxu0 %v384
    %1035 = vmatprep.subr.bf16.mxu0 0
    %1036 = vmatpush2.bf16.msra.mxu0 0
    %1037 = vmatprep.subr.bf16.mxu0 0
    %1038 = vmatpush2.bf16.msra.mxu0 0
    %1039 = vmatprep.subr.bf16.mxu0 0
    %1040 = vmatpush2.bf16.msra.mxu0 0
    %1041 = vmatprep.subr.bf16.mxu0 0
    %1042 = vmatpush2.bf16.msra.mxu0 0
    %1043 = vmatprep.subr.bf16.mxu0 0
    %1044 = vmatpush2.bf16.msra.mxu0 0
    %1045 = vmatprep.subr.bf16.mxu0 0
    %1046 = vmatpush2.bf16.msra.mxu0 0
    %1047 = vmatprep.subr.bf16.mxu0 0
    %1048 = vmatpush2.bf16.msra.mxu0 0
    %1049 = vmatprep.subr.bf16.mxu0 0
    %1050 = vmatpush2.bf16.msra.mxu0 0
    %1051 = vmatprep.mubr.bf16.mxu0 0
    %1052 = vmatmul.mubr.bf16.gmra.mxu0 %v1017
    %v1053 = vpop.f32.mrf.mxu0
    %v1054 = vadd.f32 %v969, %v1053
    %v1055 = vpop.f32.mrf.mxu0
    %v1056 = vadd.f32 %v971, %v1055
    %v1057 = vpop.f32.mrf.mxu0
    %v1058 = vpop.f32.mrf.mxu0
    %1059 = vdwg.mxu0
    %1060 = vmatprep.subr.bf16.mxu0 0
    %1061 = vmatpush1.bf16.msra.mxu0 0
    %1062 = vmatprep.subr.bf16.mxu0 0
    %1063 = vmatpush1.bf16.msra.mxu0 0
    %1064 = vmatprep.subr.bf16.mxu0 0
    %1065 = vmatpush1.bf16.msra.mxu0 0
    %1066 = vmatprep.subr.bf16.mxu0 0
    %1067 = vmatpush1.bf16.msra.mxu0 0
    %1068 = vmatprep.subr.bf16.mxu0 0
    %1069 = vmatpush1.bf16.msra.mxu0 0
    %1070 = vmatprep.subr.bf16.mxu0 0
    %1071 = vmatpush1.bf16.msra.mxu0 0
    %1072 = vmatprep.subr.bf16.mxu0 0
    %1073 = vmatpush1.bf16.msra.mxu0 0
    %1074 = vmatprep.subr.bf16.mxu0 %v387
    %1075 = vmatpush1.bf16.msra.mxu0 %v386
    %1076 = vmatprep.subr.bf16.mxu0 0
    %1077 = vmatpush2.bf16.msra.mxu0 0
    %1078 = vmatprep.subr.bf16.mxu0 0
    %1079 = vmatpush2.bf16.msra.mxu0 0
    %1080 = vmatprep.subr.bf16.mxu0 0
    %1081 = vmatpush2.bf16.msra.mxu0 0
    %1082 = vmatprep.subr.bf16.mxu0 0
    %1083 = vmatpush2.bf16.msra.mxu0 0
    %1084 = vmatprep.subr.bf16.mxu0 0
    %1085 = vmatpush2.bf16.msra.mxu0 0
    %1086 = vmatprep.subr.bf16.mxu0 0
    %1087 = vmatpush2.bf16.msra.mxu0 0
    %1088 = vmatprep.subr.bf16.mxu0 0
    %1089 = vmatpush2.bf16.msra.mxu0 0
    %1090 = vmatprep.subr.bf16.mxu0 0
    %1091 = vmatpush2.bf16.msra.mxu0 0
    %1092 = vmatprep.mubr.bf16.mxu0 0
    %1093 = vmatmul.mubr.bf16.gmra.mxu0 %v1017
    %v1094 = vpop.f32.mrf.mxu0
    %v1095 = vadd.f32 %v1010, %v1094
    %v1096 = vpop.f32.mrf.mxu0
    %v1097 = vadd.f32 %v1012, %v1096
    %v1098 = vpop.f32.mrf.mxu0
    %v1099 = vpop.f32.mrf.mxu0
    %1100 = vdwg.mxu0
    %v1101 = vadd.f32 %v1054, %v482
    %v1102 = vadd.f32 %v1056, %v486
    %v1103 = vadd.f32 %v1095, %v490
    %v1104 = vadd.f32 %v1097, %v494
    %v1105 = vxor.u32 %v1101, 2147483648
    %v1106 = vmul.f32 %v1105, 1.442695
    %v1107 = vpow.pop %v1106
    %v1108 = vadd.f32 %v1107, 1.0
    %v1109 = vrcp.pop %v1108
    %v1110 = vmul.f32 1.0, %v1109
    %v1111 = vxor.u32 %v1102, 2147483648
    %v1112 = vmul.f32 %v1111, 1.442695
    %v1113 = vpow.pop %v1112
    %v1114 = vadd.f32 %v1113, 1.0
    %v1115 = vrcp.pop %v1114
    %v1116 = vmul.f32 1.0, %v1115
    %v1117 = vtanh.pop %v1103
    %v1118 = vxor.u32 %v1104, 2147483648
    %v1119 = vmul.f32 %v1118, 1.442695
    %v1120 = vpow.pop %v1119
    %v1121 = vadd.f32 %v1120, 1.0
    %v1122 = vrcp.pop %v1121
    %v1123 = vmul.f32 1.0, %v1122
    %v1124 = vmul.f32 %v1116, %v925
    %v1125 = vmul.f32 %v1110, %v1117
    %v1126 = vadd.f32 %v1124, %v1125
    %v1127 = vtanh.pop %v1126
    %v1128 = vmul.f32 %v1123, %v1127
    %s1129 = scalar_lea.vmem [#allocation2], 6
    %1130 = vst [vmem:[%s1129] sm:$0x3] %v1128
    %s1131 = scalar_lea.vmem [#allocation4], 8
    %v1132 = vld [vmem:[%s1131] sm:$0x3]
    %v1133 = vpack.c.bf16 %v1132, %v1132
    %v1134 = vpack.c.bf16 %v1128, %v1128
    %1135 = vmatprep.subr.bf16.mxu0 %v255
    %1136 = vmatpush1.bf16.msra.mxu0 %v254
    %1137 = vmatprep.subr.bf16.mxu0 %v251
    %1138 = vmatpush1.bf16.msra.mxu0 %v250
    %1139 = vmatprep.subr.bf16.mxu0 %v247
    %1140 = vmatpush1.bf16.msra.mxu0 %v246
    %1141 = vmatprep.subr.bf16.mxu0 %v243
    %1142 = vmatpush1.bf16.msra.mxu0 %v242
    %1143 = vmatprep.subr.bf16.mxu0 %v239
    %1144 = vmatpush1.bf16.msra.mxu0 %v238
    %1145 = vmatprep.subr.bf16.mxu0 %v235
    %1146 = vmatpush1.bf16.msra.mxu0 %v234
    %1147 = vmatprep.subr.bf16.mxu0 %v231
    %1148 = vmatpush1.bf16.msra.mxu0 %v230
    %1149 = vmatprep.subr.bf16.mxu0 %v227
    %1150 = vmatpush1.bf16.msra.mxu0 %v226
    %1151 = vmatprep.subr.bf16.mxu0 0
    %1152 = vmatpush2.bf16.msra.mxu0 0
    %1153 = vmatprep.subr.bf16.mxu0 0
    %1154 = vmatpush2.bf16.msra.mxu0 0
    %1155 = vmatprep.subr.bf16.mxu0 0
    %1156 = vmatpush2.bf16.msra.mxu0 0
    %1157 = vmatprep.subr.bf16.mxu0 0
    %1158 = vmatpush2.bf16.msra.mxu0 0
    %1159 = vmatprep.subr.bf16.mxu0 0
    %1160 = vmatpush2.bf16.msra.mxu0 0
    %1161 = vmatprep.subr.bf16.mxu0 0
    %1162 = vmatpush2.bf16.msra.mxu0 0
    %1163 = vmatprep.subr.bf16.mxu0 0
    %1164 = vmatpush2.bf16.msra.mxu0 0
    %1165 = vmatprep.subr.bf16.mxu0 0
    %1166 = vmatpush2.bf16.msra.mxu0 0
    %1167 = vmatprep.mubr.bf16.mxu0 0
    %1168 = vmatmul.mubr.bf16.gmra.mxu0 %v1134
    %v1169 = vpop.f32.mrf.mxu0
    %v1170 = vadd.f32 0.0, %v1169
    %v1171 = vpop.f32.mrf.mxu0
    %v1172 = vadd.f32 0.0, %v1171
    %v1173 = vpop.f32.mrf.mxu0
    %v1174 = vpop.f32.mrf.mxu0
    %1175 = vdwg.mxu0
    %1176 = vmatprep.subr.bf16.mxu0 %v257
    %1177 = vmatpush1.bf16.msra.mxu0 %v256
    %1178 = vmatprep.subr.bf16.mxu0 %v253
    %1179 = vmatpush1.bf16.msra.mxu0 %v252
    %1180 = vmatprep.subr.bf16.mxu0 %v249
    %1181 = vmatpush1.bf16.msra.mxu0 %v248
    %1182 = vmatprep.subr.bf16.mxu0 %v245
    %1183 = vmatpush1.bf16.msra.mxu0 %v244
    %1184 = vmatprep.subr.bf16.mxu0 %v241
    %1185 = vmatpush1.bf16.msra.mxu0 %v240
    %1186 = vmatprep.subr.bf16.mxu0 %v237
    %1187 = vmatpush1.bf16.msra.mxu0 %v236
    %1188 = vmatprep.subr.bf16.mxu0 %v233
    %1189 = vmatpush1.bf16.msra.mxu0 %v232
    %1190 = vmatprep.subr.bf16.mxu0 %v229
    %1191 = vmatpush1.bf16.msra.mxu0 %v228
    %1192 = vmatprep.subr.bf16.mxu0 0
    %1193 = vmatpush2.bf16.msra.mxu0 0
    %1194 = vmatprep.subr.bf16.mxu0 0
    %1195 = vmatpush2.bf16.msra.mxu0 0
    %1196 = vmatprep.subr.bf16.mxu0 0
    %1197 = vmatpush2.bf16.msra.mxu0 0
    %1198 = vmatprep.subr.bf16.mxu0 0
    %1199 = vmatpush2.bf16.msra.mxu0 0
    %1200 = vmatprep.subr.bf16.mxu0 0
    %1201 = vmatpush2.bf16.msra.mxu0 0
    %1202 = vmatprep.subr.bf16.mxu0 0
    %1203 = vmatpush2.bf16.msra.mxu0 0
    %1204 = vmatprep.subr.bf16.mxu0 0
    %1205 = vmatpush2.bf16.msra.mxu0 0
    %1206 = vmatprep.subr.bf16.mxu0 0
    %1207 = vmatpush2.bf16.msra.mxu0 0
    %1208 = vmatprep.mubr.bf16.mxu0 0
    %1209 = vmatmul.mubr.bf16.gmra.mxu0 %v1134
    %v1210 = vpop.f32.mrf.mxu0
    %v1211 = vadd.f32 0.0, %v1210
    %v1212 = vpop.f32.mrf.mxu0
    %v1213 = vadd.f32 0.0, %v1212
    %v1214 = vpop.f32.mrf.mxu0
    %v1215 = vpop.f32.mrf.mxu0
    %1216 = vdwg.mxu0
    %v1218 = vsel %vm392, %v1133, 0
    %1220 = vmatprep.subr.bf16.mxu0 0
    %1221 = vmatpush1.bf16.msra.mxu0 0
    %1222 = vmatprep.subr.bf16.mxu0 0
    %1223 = vmatpush1.bf16.msra.mxu0 0
    %1224 = vmatprep.subr.bf16.mxu0 0
    %1225 = vmatpush1.bf16.msra.mxu0 0
    %1226 = vmatprep.subr.bf16.mxu0 0
    %1227 = vmatpush1.bf16.msra.mxu0 0
    %1228 = vmatprep.subr.bf16.mxu0 0
    %1229 = vmatpush1.bf16.msra.mxu0 0
    %1230 = vmatprep.subr.bf16.mxu0 0
    %1231 = vmatpush1.bf16.msra.mxu0 0
    %1232 = vmatprep.subr.bf16.mxu0 0
    %1233 = vmatpush1.bf16.msra.mxu0 0
    %1234 = vmatprep.subr.bf16.mxu0 %v385
    %1235 = vmatpush1.bf16.msra.mxu0 %v384
    %1236 = vmatprep.subr.bf16.mxu0 0
    %1237 = vmatpush2.bf16.msra.mxu0 0
    %1238 = vmatprep.subr.bf16.mxu0 0
    %1239 = vmatpush2.bf16.msra.mxu0 0
    %1240 = vmatprep.subr.bf16.mxu0 0
    %1241 = vmatpush2.bf16.msra.mxu0 0
    %1242 = vmatprep.subr.bf16.mxu0 0
    %1243 = vmatpush2.bf16.msra.mxu0 0
    %1244 = vmatprep.subr.bf16.mxu0 0
    %1245 = vmatpush2.bf16.msra.mxu0 0
    %1246 = vmatprep.subr.bf16.mxu0 0
    %1247 = vmatpush2.bf16.msra.mxu0 0
    %1248 = vmatprep.subr.bf16.mxu0 0
    %1249 = vmatpush2.bf16.msra.mxu0 0
    %1250 = vmatprep.subr.bf16.mxu0 0
    %1251 = vmatpush2.bf16.msra.mxu0 0
    %1252 = vmatprep.mubr.bf16.mxu0 0
    %1253 = vmatmul.mubr.bf16.gmra.mxu0 %v1218
    %v1254 = vpop.f32.mrf.mxu0
    %v1255 = vadd.f32 %v1170, %v1254
    %v1256 = vpop.f32.mrf.mxu0
    %v1257 = vadd.f32 %v1172, %v1256
    %v1258 = vpop.f32.mrf.mxu0
    %v1259 = vpop.f32.mrf.mxu0
    %1260 = vdwg.mxu0
    %1261 = vmatprep.subr.bf16.mxu0 0
    %1262 = vmatpush1.bf16.msra.mxu0 0
    %1263 = vmatprep.subr.bf16.mxu0 0
    %1264 = vmatpush1.bf16.msra.mxu0 0
    %1265 = vmatprep.subr.bf16.mxu0 0
    %1266 = vmatpush1.bf16.msra.mxu0 0
    %1267 = vmatprep.subr.bf16.mxu0 0
    %1268 = vmatpush1.bf16.msra.mxu0 0
    %1269 = vmatprep.subr.bf16.mxu0 0
    %1270 = vmatpush1.bf16.msra.mxu0 0
    %1271 = vmatprep.subr.bf16.mxu0 0
    %1272 = vmatpush1.bf16.msra.mxu0 0
    %1273 = vmatprep.subr.bf16.mxu0 0
    %1274 = vmatpush1.bf16.msra.mxu0 0
    %1275 = vmatprep.subr.bf16.mxu0 %v387
    %1276 = vmatpush1.bf16.msra.mxu0 %v386
    %1277 = vmatprep.subr.bf16.mxu0 0
    %1278 = vmatpush2.bf16.msra.mxu0 0
    %1279 = vmatprep.subr.bf16.mxu0 0
    %1280 = vmatpush2.bf16.msra.mxu0 0
    %1281 = vmatprep.subr.bf16.mxu0 0
    %1282 = vmatpush2.bf16.msra.mxu0 0
    %1283 = vmatprep.subr.bf16.mxu0 0
    %1284 = vmatpush2.bf16.msra.mxu0 0
    %1285 = vmatprep.subr.bf16.mxu0 0
    %1286 = vmatpush2.bf16.msra.mxu0 0
    %1287 = vmatprep.subr.bf16.mxu0 0
    %1288 = vmatpush2.bf16.msra.mxu0 0
    %1289 = vmatprep.subr.bf16.mxu0 0
    %1290 = vmatpush2.bf16.msra.mxu0 0
    %1291 = vmatprep.subr.bf16.mxu0 0
    %1292 = vmatpush2.bf16.msra.mxu0 0
    %1293 = vmatprep.mubr.bf16.mxu0 0
    %1294 = vmatmul.mubr.bf16.gmra.mxu0 %v1218
    %v1295 = vpop.f32.mrf.mxu0
    %v1296 = vadd.f32 %v1211, %v1295
    %v1297 = vpop.f32.mrf.mxu0
    %v1298 = vadd.f32 %v1213, %v1297
    %v1299 = vpop.f32.mrf.mxu0
    %v1300 = vpop.f32.mrf.mxu0
    %1301 = vdwg.mxu0
    %v1302 = vadd.f32 %v1255, %v482
    %v1303 = vadd.f32 %v1257, %v486
    %v1304 = vadd.f32 %v1296, %v490
    %v1305 = vadd.f32 %v1298, %v494
    %v1306 = vxor.u32 %v1302, 2147483648
    %v1307 = vmul.f32 %v1306, 1.442695
    %v1308 = vpow.pop %v1307
    %v1309 = vadd.f32 %v1308, 1.0
    %v1310 = vrcp.pop %v1309
    %v1311 = vmul.f32 1.0, %v1310
    %v1312 = vxor.u32 %v1303, 2147483648
    %v1313 = vmul.f32 %v1312, 1.442695
    %v1314 = vpow.pop %v1313
    %v1315 = vadd.f32 %v1314, 1.0
    %v1316 = vrcp.pop %v1315
    %v1317 = vmul.f32 1.0, %v1316
    %v1318 = vtanh.pop %v1304
    %v1319 = vxor.u32 %v1305, 2147483648
    %v1320 = vmul.f32 %v1319, 1.442695
    %v1321 = vpow.pop %v1320
    %v1322 = vadd.f32 %v1321, 1.0
    %v1323 = vrcp.pop %v1322
    %v1324 = vmul.f32 1.0, %v1323
    %v1325 = vmul.f32 %v1317, %v1126
    %v1326 = vmul.f32 %v1311, %v1318
    %v1327 = vadd.f32 %v1325, %v1326
    %v1328 = vtanh.pop %v1327
    %v1329 = vmul.f32 %v1324, %v1328
    %s1330 = scalar_lea.vmem [#allocation2], 8
    %1331 = vst [vmem:[%s1330] sm:$0x3] %v1329
    %s1332 = scalar_lea.vmem [#allocation4], 10
    %v1333 = vld [vmem:[%s1332] sm:$0x3]
    %v1334 = vpack.c.bf16 %v1333, %v1333
    %v1335 = vpack.c.bf16 %v1329, %v1329
    %1336 = vmatprep.subr.bf16.mxu0 %v255
    %1337 = vmatpush1.bf16.msra.mxu0 %v254
    %1338 = vmatprep.subr.bf16.mxu0 %v251
    %1339 = vmatpush1.bf16.msra.mxu0 %v250
    %1340 = vmatprep.subr.bf16.mxu0 %v247
    %1341 = vmatpush1.bf16.msra.mxu0 %v246
    %1342 = vmatprep.subr.bf16.mxu0 %v243
    %1343 = vmatpush1.bf16.msra.mxu0 %v242
    %1344 = vmatprep.subr.bf16.mxu0 %v239
    %1345 = vmatpush1.bf16.msra.mxu0 %v238
    %1346 = vmatprep.subr.bf16.mxu0 %v235
    %1347 = vmatpush1.bf16.msra.mxu0 %v234
    %1348 = vmatprep.subr.bf16.mxu0 %v231
    %1349 = vmatpush1.bf16.msra.mxu0 %v230
    %1350 = vmatprep.subr.bf16.mxu0 %v227
    %1351 = vmatpush1.bf16.msra.mxu0 %v226
    %1352 = vmatprep.subr.bf16.mxu0 0
    %1353 = vmatpush2.bf16.msra.mxu0 0
    %1354 = vmatprep.subr.bf16.mxu0 0
    %1355 = vmatpush2.bf16.msra.mxu0 0
    %1356 = vmatprep.subr.bf16.mxu0 0
    %1357 = vmatpush2.bf16.msra.mxu0 0
    %1358 = vmatprep.subr.bf16.mxu0 0
    %1359 = vmatpush2.bf16.msra.mxu0 0
    %1360 = vmatprep.subr.bf16.mxu0 0
    %1361 = vmatpush2.bf16.msra.mxu0 0
    %1362 = vmatprep.subr.bf16.mxu0 0
    %1363 = vmatpush2.bf16.msra.mxu0 0
    %1364 = vmatprep.subr.bf16.mxu0 0
    %1365 = vmatpush2.bf16.msra.mxu0 0
    %1366 = vmatprep.subr.bf16.mxu0 0
    %1367 = vmatpush2.bf16.msra.mxu0 0
    %1368 = vmatprep.mubr.bf16.mxu0 0
    %1369 = vmatmul.mubr.bf16.gmra.mxu0 %v1335
    %v1370 = vpop.f32.mrf.mxu0
    %v1371 = vadd.f32 0.0, %v1370
    %v1372 = vpop.f32.mrf.mxu0
    %v1373 = vadd.f32 0.0, %v1372
    %v1374 = vpop.f32.mrf.mxu0
    %v1375 = vpop.f32.mrf.mxu0
    %1376 = vdwg.mxu0
    %1377 = vmatprep.subr.bf16.mxu0 %v257
    %1378 = vmatpush1.bf16.msra.mxu0 %v256
    %1379 = vmatprep.subr.bf16.mxu0 %v253
    %1380 = vmatpush1.bf16.msra.mxu0 %v252
    %1381 = vmatprep.subr.bf16.mxu0 %v249
    %1382 = vmatpush1.bf16.msra.mxu0 %v248
    %1383 = vmatprep.subr.bf16.mxu0 %v245
    %1384 = vmatpush1.bf16.msra.mxu0 %v244
    %1385 = vmatprep.subr.bf16.mxu0 %v241
    %1386 = vmatpush1.bf16.msra.mxu0 %v240
    %1387 = vmatprep.subr.bf16.mxu0 %v237
    %1388 = vmatpush1.bf16.msra.mxu0 %v236
    %1389 = vmatprep.subr.bf16.mxu0 %v233
    %1390 = vmatpush1.bf16.msra.mxu0 %v232
    %1391 = vmatprep.subr.bf16.mxu0 %v229
    %1392 = vmatpush1.bf16.msra.mxu0 %v228
    %1393 = vmatprep.subr.bf16.mxu0 0
    %1394 = vmatpush2.bf16.msra.mxu0 0
    %1395 = vmatprep.subr.bf16.mxu0 0
    %1396 = vmatpush2.bf16.msra.mxu0 0
    %1397 = vmatprep.subr.bf16.mxu0 0
    %1398 = vmatpush2.bf16.msra.mxu0 0
    %1399 = vmatprep.subr.bf16.mxu0 0
    %1400 = vmatpush2.bf16.msra.mxu0 0
    %1401 = vmatprep.subr.bf16.mxu0 0
    %1402 = vmatpush2.bf16.msra.mxu0 0
    %1403 = vmatprep.subr.bf16.mxu0 0
    %1404 = vmatpush2.bf16.msra.mxu0 0
    %1405 = vmatprep.subr.bf16.mxu0 0
    %1406 = vmatpush2.bf16.msra.mxu0 0
    %1407 = vmatprep.subr.bf16.mxu0 0
    %1408 = vmatpush2.bf16.msra.mxu0 0
    %1409 = vmatprep.mubr.bf16.mxu0 0
    %1410 = vmatmul.mubr.bf16.gmra.mxu0 %v1335
    %v1411 = vpop.f32.mrf.mxu0
    %v1412 = vadd.f32 0.0, %v1411
    %v1413 = vpop.f32.mrf.mxu0
    %v1414 = vadd.f32 0.0, %v1413
    %v1415 = vpop.f32.mrf.mxu0
    %v1416 = vpop.f32.mrf.mxu0
    %1417 = vdwg.mxu0
    %v1419 = vsel %vm392, %v1334, 0
    %1421 = vmatprep.subr.bf16.mxu0 0
    %1422 = vmatpush1.bf16.msra.mxu0 0
    %1423 = vmatprep.subr.bf16.mxu0 0
    %1424 = vmatpush1.bf16.msra.mxu0 0
    %1425 = vmatprep.subr.bf16.mxu0 0
    %1426 = vmatpush1.bf16.msra.mxu0 0
    %1427 = vmatprep.subr.bf16.mxu0 0
    %1428 = vmatpush1.bf16.msra.mxu0 0
    %1429 = vmatprep.subr.bf16.mxu0 0
    %1430 = vmatpush1.bf16.msra.mxu0 0
    %1431 = vmatprep.subr.bf16.mxu0 0
    %1432 = vmatpush1.bf16.msra.mxu0 0
    %1433 = vmatprep.subr.bf16.mxu0 0
    %1434 = vmatpush1.bf16.msra.mxu0 0
    %1435 = vmatprep.subr.bf16.mxu0 %v385
    %1436 = vmatpush1.bf16.msra.mxu0 %v384
    %1437 = vmatprep.subr.bf16.mxu0 0
    %1438 = vmatpush2.bf16.msra.mxu0 0
    %1439 = vmatprep.subr.bf16.mxu0 0
    %1440 = vmatpush2.bf16.msra.mxu0 0
    %1441 = vmatprep.subr.bf16.mxu0 0
    %1442 = vmatpush2.bf16.msra.mxu0 0
    %1443 = vmatprep.subr.bf16.mxu0 0
    %1444 = vmatpush2.bf16.msra.mxu0 0
    %1445 = vmatprep.subr.bf16.mxu0 0
    %1446 = vmatpush2.bf16.msra.mxu0 0
    %1447 = vmatprep.subr.bf16.mxu0 0
    %1448 = vmatpush2.bf16.msra.mxu0 0
    %1449 = vmatprep.subr.bf16.mxu0 0
    %1450 = vmatpush2.bf16.msra.mxu0 0
    %1451 = vmatprep.subr.bf16.mxu0 0
    %1452 = vmatpush2.bf16.msra.mxu0 0
    %1453 = vmatprep.mubr.bf16.mxu0 0
    %1454 = vmatmul.mubr.bf16.gmra.mxu0 %v1419
    %v1455 = vpop.f32.mrf.mxu0
    %v1456 = vadd.f32 %v1371, %v1455
    %v1457 = vpop.f32.mrf.mxu0
    %v1458 = vadd.f32 %v1373, %v1457
    %v1459 = vpop.f32.mrf.mxu0
    %v1460 = vpop.f32.mrf.mxu0
    %1461 = vdwg.mxu0
    %1462 = vmatprep.subr.bf16.mxu0 0
    %1463 = vmatpush1.bf16.msra.mxu0 0
    %1464 = vmatprep.subr.bf16.mxu0 0
    %1465 = vmatpush1.bf16.msra.mxu0 0
    %1466 = vmatprep.subr.bf16.mxu0 0
    %1467 = vmatpush1.bf16.msra.mxu0 0
    %1468 = vmatprep.subr.bf16.mxu0 0
    %1469 = vmatpush1.bf16.msra.mxu0 0
    %1470 = vmatprep.subr.bf16.mxu0 0
    %1471 = vmatpush1.bf16.msra.mxu0 0
    %1472 = vmatprep.subr.bf16.mxu0 0
    %1473 = vmatpush1.bf16.msra.mxu0 0
    %1474 = vmatprep.subr.bf16.mxu0 0
    %1475 = vmatpush1.bf16.msra.mxu0 0
    %1476 = vmatprep.subr.bf16.mxu0 %v387
    %1477 = vmatpush1.bf16.msra.mxu0 %v386
    %1478 = vmatprep.subr.bf16.mxu0 0
    %1479 = vmatpush2.bf16.msra.mxu0 0
    %1480 = vmatprep.subr.bf16.mxu0 0
    %1481 = vmatpush2.bf16.msra.mxu0 0
    %1482 = vmatprep.subr.bf16.mxu0 0
    %1483 = vmatpush2.bf16.msra.mxu0 0
    %1484 = vmatprep.subr.bf16.mxu0 0
    %1485 = vmatpush2.bf16.msra.mxu0 0
    %1486 = vmatprep.subr.bf16.mxu0 0
    %1487 = vmatpush2.bf16.msra.mxu0 0
    %1488 = vmatprep.subr.bf16.mxu0 0
    %1489 = vmatpush2.bf16.msra.mxu0 0
    %1490 = vmatprep.subr.bf16.mxu0 0
    %1491 = vmatpush2.bf16.msra.mxu0 0
    %1492 = vmatprep.subr.bf16.mxu0 0
    %1493 = vmatpush2.bf16.msra.mxu0 0
    %1494 = vmatprep.mubr.bf16.mxu0 0
    %1495 = vmatmul.mubr.bf16.gmra.mxu0 %v1419
    %v1496 = vpop.f32.mrf.mxu0
    %v1497 = vadd.f32 %v1412, %v1496
    %v1498 = vpop.f32.mrf.mxu0
    %v1499 = vadd.f32 %v1414, %v1498
    %v1500 = vpop.f32.mrf.mxu0
    %v1501 = vpop.f32.mrf.mxu0
    %1502 = vdwg.mxu0
    %v1503 = vadd.f32 %v1456, %v482
    %v1504 = vadd.f32 %v1458, %v486
    %v1505 = vadd.f32 %v1497, %v490
    %v1506 = vadd.f32 %v1499, %v494
    %v1507 = vxor.u32 %v1503, 2147483648
    %v1508 = vmul.f32 %v1507, 1.442695
    %v1509 = vpow.pop %v1508
    %v1510 = vadd.f32 %v1509, 1.0
    %v1511 = vrcp.pop %v1510
    %v1512 = vmul.f32 1.0, %v1511
    %v1513 = vxor.u32 %v1504, 2147483648
    %v1514 = vmul.f32 %v1513, 1.442695
    %v1515 = vpow.pop %v1514
    %v1516 = vadd.f32 %v1515, 1.0
    %v1517 = vrcp.pop %v1516
    %v1518 = vmul.f32 1.0, %v1517
    %v1519 = vtanh.pop %v1505
    %v1520 = vxor.u32 %v1506, 2147483648
    %v1521 = vmul.f32 %v1520, 1.442695
    %v1522 = vpow.pop %v1521
    %v1523 = vadd.f32 %v1522, 1.0
    %v1524 = vrcp.pop %v1523
    %v1525 = vmul.f32 1.0, %v1524
    %v1526 = vmul.f32 %v1518, %v1327
    %v1527 = vmul.f32 %v1512, %v1519
    %v1528 = vadd.f32 %v1526, %v1527
    %v1529 = vtanh.pop %v1528
    %v1530 = vmul.f32 %v1525, %v1529
    %s1531 = scalar_lea.vmem [#allocation2], 10
    %1532 = vst [vmem:[%s1531] sm:$0x3] %v1530
    %s1533 = scalar_lea.vmem [#allocation4], 12
    %v1534 = vld [vmem:[%s1533] sm:$0x3]
    %v1535 = vpack.c.bf16 %v1534, %v1534
    %v1536 = vpack.c.bf16 %v1530, %v1530
    %1537 = vmatprep.subr.bf16.mxu0 %v255
    %1538 = vmatpush1.bf16.msra.mxu0 %v254
    %1539 = vmatprep.subr.bf16.mxu0 %v251
    %1540 = vmatpush1.bf16.msra.mxu0 %v250
    %1541 = vmatprep.subr.bf16.mxu0 %v247
    %1542 = vmatpush1.bf16.msra.mxu0 %v246
    %1543 = vmatprep.subr.bf16.mxu0 %v243
    %1544 = vmatpush1.bf16.msra.mxu0 %v242
    %1545 = vmatprep.subr.bf16.mxu0 %v239
    %1546 = vmatpush1.bf16.msra.mxu0 %v238
    %1547 = vmatprep.subr.bf16.mxu0 %v235
    %1548 = vmatpush1.bf16.msra.mxu0 %v234
    %1549 = vmatprep.subr.bf16.mxu0 %v231
    %1550 = vmatpush1.bf16.msra.mxu0 %v230
    %1551 = vmatprep.subr.bf16.mxu0 %v227
    %1552 = vmatpush1.bf16.msra.mxu0 %v226
    %1553 = vmatprep.subr.bf16.mxu0 0
    %1554 = vmatpush2.bf16.msra.mxu0 0
    %1555 = vmatprep.subr.bf16.mxu0 0
    %1556 = vmatpush2.bf16.msra.mxu0 0
    %1557 = vmatprep.subr.bf16.mxu0 0
    %1558 = vmatpush2.bf16.msra.mxu0 0
    %1559 = vmatprep.subr.bf16.mxu0 0
    %1560 = vmatpush2.bf16.msra.mxu0 0
    %1561 = vmatprep.subr.bf16.mxu0 0
    %1562 = vmatpush2.bf16.msra.mxu0 0
    %1563 = vmatprep.subr.bf16.mxu0 0
    %1564 = vmatpush2.bf16.msra.mxu0 0
    %1565 = vmatprep.subr.bf16.mxu0 0
    %1566 = vmatpush2.bf16.msra.mxu0 0
    %1567 = vmatprep.subr.bf16.mxu0 0
    %1568 = vmatpush2.bf16.msra.mxu0 0
    %1569 = vmatprep.mubr.bf16.mxu0 0
    %1570 = vmatmul.mubr.bf16.gmra.mxu0 %v1536
    %v1571 = vpop.f32.mrf.mxu0
    %v1572 = vadd.f32 0.0, %v1571
    %v1573 = vpop.f32.mrf.mxu0
    %v1574 = vadd.f32 0.0, %v1573
    %v1575 = vpop.f32.mrf.mxu0
    %v1576 = vpop.f32.mrf.mxu0
    %1577 = vdwg.mxu0
    %1578 = vmatprep.subr.bf16.mxu0 %v257
    %1579 = vmatpush1.bf16.msra.mxu0 %v256
    %1580 = vmatprep.subr.bf16.mxu0 %v253
    %1581 = vmatpush1.bf16.msra.mxu0 %v252
    %1582 = vmatprep.subr.bf16.mxu0 %v249
    %1583 = vmatpush1.bf16.msra.mxu0 %v248
    %1584 = vmatprep.subr.bf16.mxu0 %v245
    %1585 = vmatpush1.bf16.msra.mxu0 %v244
    %1586 = vmatprep.subr.bf16.mxu0 %v241
    %1587 = vmatpush1.bf16.msra.mxu0 %v240
    %1588 = vmatprep.subr.bf16.mxu0 %v237
    %1589 = vmatpush1.bf16.msra.mxu0 %v236
    %1590 = vmatprep.subr.bf16.mxu0 %v233
    %1591 = vmatpush1.bf16.msra.mxu0 %v232
    %1592 = vmatprep.subr.bf16.mxu0 %v229
    %1593 = vmatpush1.bf16.msra.mxu0 %v228
    %1594 = vmatprep.subr.bf16.mxu0 0
    %1595 = vmatpush2.bf16.msra.mxu0 0
    %1596 = vmatprep.subr.bf16.mxu0 0
    %1597 = vmatpush2.bf16.msra.mxu0 0
    %1598 = vmatprep.subr.bf16.mxu0 0
    %1599 = vmatpush2.bf16.msra.mxu0 0
    %1600 = vmatprep.subr.bf16.mxu0 0
    %1601 = vmatpush2.bf16.msra.mxu0 0
    %1602 = vmatprep.subr.bf16.mxu0 0
    %1603 = vmatpush2.bf16.msra.mxu0 0
    %1604 = vmatprep.subr.bf16.mxu0 0
    %1605 = vmatpush2.bf16.msra.mxu0 0
    %1606 = vmatprep.subr.bf16.mxu0 0
    %1607 = vmatpush2.bf16.msra.mxu0 0
    %1608 = vmatprep.subr.bf16.mxu0 0
    %1609 = vmatpush2.bf16.msra.mxu0 0
    %1610 = vmatprep.mubr.bf16.mxu0 0
    %1611 = vmatmul.mubr.bf16.gmra.mxu0 %v1536
    %v1612 = vpop.f32.mrf.mxu0
    %v1613 = vadd.f32 0.0, %v1612
    %v1614 = vpop.f32.mrf.mxu0
    %v1615 = vadd.f32 0.0, %v1614
    %v1616 = vpop.f32.mrf.mxu0
    %v1617 = vpop.f32.mrf.mxu0
    %1618 = vdwg.mxu0
    %v1620 = vsel %vm392, %v1535, 0
    %1622 = vmatprep.subr.bf16.mxu0 0
    %1623 = vmatpush1.bf16.msra.mxu0 0
    %1624 = vmatprep.subr.bf16.mxu0 0
    %1625 = vmatpush1.bf16.msra.mxu0 0
    %1626 = vmatprep.subr.bf16.mxu0 0
    %1627 = vmatpush1.bf16.msra.mxu0 0
    %1628 = vmatprep.subr.bf16.mxu0 0
    %1629 = vmatpush1.bf16.msra.mxu0 0
    %1630 = vmatprep.subr.bf16.mxu0 0
    %1631 = vmatpush1.bf16.msra.mxu0 0
    %1632 = vmatprep.subr.bf16.mxu0 0
    %1633 = vmatpush1.bf16.msra.mxu0 0
    %1634 = vmatprep.subr.bf16.mxu0 0
    %1635 = vmatpush1.bf16.msra.mxu0 0
    %1636 = vmatprep.subr.bf16.mxu0 %v385
    %1637 = vmatpush1.bf16.msra.mxu0 %v384
    %1638 = vmatprep.subr.bf16.mxu0 0
    %1639 = vmatpush2.bf16.msra.mxu0 0
    %1640 = vmatprep.subr.bf16.mxu0 0
    %1641 = vmatpush2.bf16.msra.mxu0 0
    %1642 = vmatprep.subr.bf16.mxu0 0
    %1643 = vmatpush2.bf16.msra.mxu0 0
    %1644 = vmatprep.subr.bf16.mxu0 0
    %1645 = vmatpush2.bf16.msra.mxu0 0
    %1646 = vmatprep.subr.bf16.mxu0 0
    %1647 = vmatpush2.bf16.msra.mxu0 0
    %1648 = vmatprep.subr.bf16.mxu0 0
    %1649 = vmatpush2.bf16.msra.mxu0 0
    %1650 = vmatprep.subr.bf16.mxu0 0
    %1651 = vmatpush2.bf16.msra.mxu0 0
    %1652 = vmatprep.subr.bf16.mxu0 0
    %1653 = vmatpush2.bf16.msra.mxu0 0
    %1654 = vmatprep.mubr.bf16.mxu0 0
    %1655 = vmatmul.mubr.bf16.gmra.mxu0 %v1620
    %v1656 = vpop.f32.mrf.mxu0
    %v1657 = vadd.f32 %v1572, %v1656
    %v1658 = vpop.f32.mrf.mxu0
    %v1659 = vadd.f32 %v1574, %v1658
    %v1660 = vpop.f32.mrf.mxu0
    %v1661 = vpop.f32.mrf.mxu0
    %1662 = vdwg.mxu0
    %1663 = vmatprep.subr.bf16.mxu0 0
    %1664 = vmatpush1.bf16.msra.mxu0 0
    %1665 = vmatprep.subr.bf16.mxu0 0
    %1666 = vmatpush1.bf16.msra.mxu0 0
    %1667 = vmatprep.subr.bf16.mxu0 0
    %1668 = vmatpush1.bf16.msra.mxu0 0
    %1669 = vmatprep.subr.bf16.mxu0 0
    %1670 = vmatpush1.bf16.msra.mxu0 0
    %1671 = vmatprep.subr.bf16.mxu0 0
    %1672 = vmatpush1.bf16.msra.mxu0 0
    %1673 = vmatprep.subr.bf16.mxu0 0
    %1674 = vmatpush1.bf16.msra.mxu0 0
    %1675 = vmatprep.subr.bf16.mxu0 0
    %1676 = vmatpush1.bf16.msra.mxu0 0
    %1677 = vmatprep.subr.bf16.mxu0 %v387
    %1678 = vmatpush1.bf16.msra.mxu0 %v386
    %1679 = vmatprep.subr.bf16.mxu0 0
    %1680 = vmatpush2.bf16.msra.mxu0 0
    %1681 = vmatprep.subr.bf16.mxu0 0
    %1682 = vmatpush2.bf16.msra.mxu0 0
    %1683 = vmatprep.subr.bf16.mxu0 0
    %1684 = vmatpush2.bf16.msra.mxu0 0
    %1685 = vmatprep.subr.bf16.mxu0 0
    %1686 = vmatpush2.bf16.msra.mxu0 0
    %1687 = vmatprep.subr.bf16.mxu0 0
    %1688 = vmatpush2.bf16.msra.mxu0 0
    %1689 = vmatprep.subr.bf16.mxu0 0
    %1690 = vmatpush2.bf16.msra.mxu0 0
    %1691 = vmatprep.subr.bf16.mxu0 0
    %1692 = vmatpush2.bf16.msra.mxu0 0
    %1693 = vmatprep.subr.bf16.mxu0 0
    %1694 = vmatpush2.bf16.msra.mxu0 0
    %1695 = vmatprep.mubr.bf16.mxu0 0
    %1696 = vmatmul.mubr.bf16.gmra.mxu0 %v1620
    %v1697 = vpop.f32.mrf.mxu0
    %v1698 = vadd.f32 %v1613, %v1697
    %v1699 = vpop.f32.mrf.mxu0
    %v1700 = vadd.f32 %v1615, %v1699
    %v1701 = vpop.f32.mrf.mxu0
    %v1702 = vpop.f32.mrf.mxu0
    %1703 = vdwg.mxu0
    %v1704 = vadd.f32 %v1657, %v482
    %v1705 = vadd.f32 %v1659, %v486
    %v1706 = vadd.f32 %v1698, %v490
    %v1707 = vadd.f32 %v1700, %v494
    %v1708 = vxor.u32 %v1704, 2147483648
    %v1709 = vmul.f32 %v1708, 1.442695
    %v1710 = vpow.pop %v1709
    %v1711 = vadd.f32 %v1710, 1.0
    %v1712 = vrcp.pop %v1711
    %v1713 = vmul.f32 1.0, %v1712
    %v1714 = vxor.u32 %v1705, 2147483648
    %v1715 = vmul.f32 %v1714, 1.442695
    %v1716 = vpow.pop %v1715
    %v1717 = vadd.f32 %v1716, 1.0
    %v1718 = vrcp.pop %v1717
    %v1719 = vmul.f32 1.0, %v1718
    %v1720 = vtanh.pop %v1706
    %v1721 = vxor.u32 %v1707, 2147483648
    %v1722 = vmul.f32 %v1721, 1.442695
    %v1723 = vpow.pop %v1722
    %v1724 = vadd.f32 %v1723, 1.0
    %v1725 = vrcp.pop %v1724
    %v1726 = vmul.f32 1.0, %v1725
    %v1727 = vmul.f32 %v1719, %v1528
    %v1728 = vmul.f32 %v1713, %v1720
    %v1729 = vadd.f32 %v1727, %v1728
    %v1730 = vtanh.pop %v1729
    %v1731 = vmul.f32 %v1726, %v1730
    %s1732 = scalar_lea.vmem [#allocation2], 12
    %1733 = vst [vmem:[%s1732] sm:$0x3] %v1731
    %s1734 = scalar_lea.vmem [#allocation4], 14
    %v1735 = vld [vmem:[%s1734] sm:$0x3]
    %v1736 = vpack.c.bf16 %v1735, %v1735
    %v1737 = vpack.c.bf16 %v1731, %v1731
    %1738 = vmatprep.subr.bf16.mxu0 %v255
    %1739 = vmatpush1.bf16.msra.mxu0 %v254
    %1740 = vmatprep.subr.bf16.mxu0 %v251
    %1741 = vmatpush1.bf16.msra.mxu0 %v250
    %1742 = vmatprep.subr.bf16.mxu0 %v247
    %1743 = vmatpush1.bf16.msra.mxu0 %v246
    %1744 = vmatprep.subr.bf16.mxu0 %v243
    %1745 = vmatpush1.bf16.msra.mxu0 %v242
    %1746 = vmatprep.subr.bf16.mxu0 %v239
    %1747 = vmatpush1.bf16.msra.mxu0 %v238
    %1748 = vmatprep.subr.bf16.mxu0 %v235
    %1749 = vmatpush1.bf16.msra.mxu0 %v234
    %1750 = vmatprep.subr.bf16.mxu0 %v231
    %1751 = vmatpush1.bf16.msra.mxu0 %v230
    %1752 = vmatprep.subr.bf16.mxu0 %v227
    %1753 = vmatpush1.bf16.msra.mxu0 %v226
    %1754 = vmatprep.subr.bf16.mxu0 0
    %1755 = vmatpush2.bf16.msra.mxu0 0
    %1756 = vmatprep.subr.bf16.mxu0 0
    %1757 = vmatpush2.bf16.msra.mxu0 0
    %1758 = vmatprep.subr.bf16.mxu0 0
    %1759 = vmatpush2.bf16.msra.mxu0 0
    %1760 = vmatprep.subr.bf16.mxu0 0
    %1761 = vmatpush2.bf16.msra.mxu0 0
    %1762 = vmatprep.subr.bf16.mxu0 0
    %1763 = vmatpush2.bf16.msra.mxu0 0
    %1764 = vmatprep.subr.bf16.mxu0 0
    %1765 = vmatpush2.bf16.msra.mxu0 0
    %1766 = vmatprep.subr.bf16.mxu0 0
    %1767 = vmatpush2.bf16.msra.mxu0 0
    %1768 = vmatprep.subr.bf16.mxu0 0
    %1769 = vmatpush2.bf16.msra.mxu0 0
    %1770 = vmatprep.mubr.bf16.mxu0 0
    %1771 = vmatmul.mubr.bf16.gmra.mxu0 %v1737
    %v1772 = vpop.f32.mrf.mxu0
    %v1773 = vadd.f32 0.0, %v1772
    %v1774 = vpop.f32.mrf.mxu0
    %v1775 = vadd.f32 0.0, %v1774
    %v1776 = vpop.f32.mrf.mxu0
    %v1777 = vpop.f32.mrf.mxu0
    %1778 = vdwg.mxu0
    %1779 = vmatprep.subr.bf16.mxu0 %v257
    %1780 = vmatpush1.bf16.msra.mxu0 %v256
    %1781 = vmatprep.subr.bf16.mxu0 %v253
    %1782 = vmatpush1.bf16.msra.mxu0 %v252
    %1783 = vmatprep.subr.bf16.mxu0 %v249
    %1784 = vmatpush1.bf16.msra.mxu0 %v248
    %1785 = vmatprep.subr.bf16.mxu0 %v245
    %1786 = vmatpush1.bf16.msra.mxu0 %v244
    %1787 = vmatprep.subr.bf16.mxu0 %v241
    %1788 = vmatpush1.bf16.msra.mxu0 %v240
    %1789 = vmatprep.subr.bf16.mxu0 %v237
    %1790 = vmatpush1.bf16.msra.mxu0 %v236
    %1791 = vmatprep.subr.bf16.mxu0 %v233
    %1792 = vmatpush1.bf16.msra.mxu0 %v232
    %1793 = vmatprep.subr.bf16.mxu0 %v229
    %1794 = vmatpush1.bf16.msra.mxu0 %v228
    %1795 = vmatprep.subr.bf16.mxu0 0
    %1796 = vmatpush2.bf16.msra.mxu0 0
    %1797 = vmatprep.subr.bf16.mxu0 0
    %1798 = vmatpush2.bf16.msra.mxu0 0
    %1799 = vmatprep.subr.bf16.mxu0 0
    %1800 = vmatpush2.bf16.msra.mxu0 0
    %1801 = vmatprep.subr.bf16.mxu0 0
    %1802 = vmatpush2.bf16.msra.mxu0 0
    %1803 = vmatprep.subr.bf16.mxu0 0
    %1804 = vmatpush2.bf16.msra.mxu0 0
    %1805 = vmatprep.subr.bf16.mxu0 0
    %1806 = vmatpush2.bf16.msra.mxu0 0
    %1807 = vmatprep.subr.bf16.mxu0 0
    %1808 = vmatpush2.bf16.msra.mxu0 0
    %1809 = vmatprep.subr.bf16.mxu0 0
    %1810 = vmatpush2.bf16.msra.mxu0 0
    %1811 = vmatprep.mubr.bf16.mxu0 0
    %1812 = vmatmul.mubr.bf16.gmra.mxu0 %v1737
    %v1813 = vpop.f32.mrf.mxu0
    %v1814 = vadd.f32 0.0, %v1813
    %v1815 = vpop.f32.mrf.mxu0
    %v1816 = vadd.f32 0.0, %v1815
    %v1817 = vpop.f32.mrf.mxu0
    %v1818 = vpop.f32.mrf.mxu0
    %1819 = vdwg.mxu0
    %v1821 = vsel %vm392, %v1736, 0
    %1823 = vmatprep.subr.bf16.mxu0 0
    %1824 = vmatpush1.bf16.msra.mxu0 0
    %1825 = vmatprep.subr.bf16.mxu0 0
    %1826 = vmatpush1.bf16.msra.mxu0 0
    %1827 = vmatprep.subr.bf16.mxu0 0
    %1828 = vmatpush1.bf16.msra.mxu0 0
    %1829 = vmatprep.subr.bf16.mxu0 0
    %1830 = vmatpush1.bf16.msra.mxu0 0
    %1831 = vmatprep.subr.bf16.mxu0 0
    %1832 = vmatpush1.bf16.msra.mxu0 0
    %1833 = vmatprep.subr.bf16.mxu0 0
    %1834 = vmatpush1.bf16.msra.mxu0 0
    %1835 = vmatprep.subr.bf16.mxu0 0
    %1836 = vmatpush1.bf16.msra.mxu0 0
    %1837 = vmatprep.subr.bf16.mxu0 %v385
    %1838 = vmatpush1.bf16.msra.mxu0 %v384
    %1839 = vmatprep.subr.bf16.mxu0 0
    %1840 = vmatpush2.bf16.msra.mxu0 0
    %1841 = vmatprep.subr.bf16.mxu0 0
    %1842 = vmatpush2.bf16.msra.mxu0 0
    %1843 = vmatprep.subr.bf16.mxu0 0
    %1844 = vmatpush2.bf16.msra.mxu0 0
    %1845 = vmatprep.subr.bf16.mxu0 0
    %1846 = vmatpush2.bf16.msra.mxu0 0
    %1847 = vmatprep.subr.bf16.mxu0 0
    %1848 = vmatpush2.bf16.msra.mxu0 0
    %1849 = vmatprep.subr.bf16.mxu0 0
    %1850 = vmatpush2.bf16.msra.mxu0 0
    %1851 = vmatprep.subr.bf16.mxu0 0
    %1852 = vmatpush2.bf16.msra.mxu0 0
    %1853 = vmatprep.subr.bf16.mxu0 0
    %1854 = vmatpush2.bf16.msra.mxu0 0
    %1855 = vmatprep.mubr.bf16.mxu0 0
    %1856 = vmatmul.mubr.bf16.gmra.mxu0 %v1821
    %v1857 = vpop.f32.mrf.mxu0
    %v1858 = vadd.f32 %v1773, %v1857
    %v1859 = vpop.f32.mrf.mxu0
    %v1860 = vadd.f32 %v1775, %v1859
    %v1861 = vpop.f32.mrf.mxu0
    %v1862 = vpop.f32.mrf.mxu0
    %1863 = vdwg.mxu0
    %1864 = vmatprep.subr.bf16.mxu0 0
    %1865 = vmatpush1.bf16.msra.mxu0 0
    %1866 = vmatprep.subr.bf16.mxu0 0
    %1867 = vmatpush1.bf16.msra.mxu0 0
    %1868 = vmatprep.subr.bf16.mxu0 0
    %1869 = vmatpush1.bf16.msra.mxu0 0
    %1870 = vmatprep.subr.bf16.mxu0 0
    %1871 = vmatpush1.bf16.msra.mxu0 0
    %1872 = vmatprep.subr.bf16.mxu0 0
    %1873 = vmatpush1.bf16.msra.mxu0 0
    %1874 = vmatprep.subr.bf16.mxu0 0
    %1875 = vmatpush1.bf16.msra.mxu0 0
    %1876 = vmatprep.subr.bf16.mxu0 0
    %1877 = vmatpush1.bf16.msra.mxu0 0
    %1878 = vmatprep.subr.bf16.mxu0 %v387
    %1879 = vmatpush1.bf16.msra.mxu0 %v386
    %1880 = vmatprep.subr.bf16.mxu0 0
    %1881 = vmatpush2.bf16.msra.mxu0 0
    %1882 = vmatprep.subr.bf16.mxu0 0
    %1883 = vmatpush2.bf16.msra.mxu0 0
    %1884 = vmatprep.subr.bf16.mxu0 0
    %1885 = vmatpush2.bf16.msra.mxu0 0
    %1886 = vmatprep.subr.bf16.mxu0 0
    %1887 = vmatpush2.bf16.msra.mxu0 0
    %1888 = vmatprep.subr.bf16.mxu0 0
    %1889 = vmatpush2.bf16.msra.mxu0 0
    %1890 = vmatprep.subr.bf16.mxu0 0
    %1891 = vmatpush2.bf16.msra.mxu0 0
    %1892 = vmatprep.subr.bf16.mxu0 0
    %1893 = vmatpush2.bf16.msra.mxu0 0
    %1894 = vmatprep.subr.bf16.mxu0 0
    %1895 = vmatpush2.bf16.msra.mxu0 0
    %1896 = vmatprep.mubr.bf16.mxu0 0
    %1897 = vmatmul.mubr.bf16.gmra.mxu0 %v1821
    %v1898 = vpop.f32.mrf.mxu0
    %v1899 = vadd.f32 %v1814, %v1898
    %v1900 = vpop.f32.mrf.mxu0
    %v1901 = vadd.f32 %v1816, %v1900
    %v1902 = vpop.f32.mrf.mxu0
    %v1903 = vpop.f32.mrf.mxu0
    %1904 = vdwg.mxu0
    %v1905 = vadd.f32 %v1858, %v482
    %v1906 = vadd.f32 %v1860, %v486
    %v1907 = vadd.f32 %v1899, %v490
    %v1908 = vadd.f32 %v1901, %v494
    %v1909 = vxor.u32 %v1905, 2147483648
    %v1910 = vmul.f32 %v1909, 1.442695
    %v1911 = vpow.pop %v1910
    %v1912 = vadd.f32 %v1911, 1.0
    %v1913 = vrcp.pop %v1912
    %v1914 = vmul.f32 1.0, %v1913
    %v1915 = vxor.u32 %v1906, 2147483648
    %v1916 = vmul.f32 %v1915, 1.442695
    %v1917 = vpow.pop %v1916
    %v1918 = vadd.f32 %v1917, 1.0
    %v1919 = vrcp.pop %v1918
    %v1920 = vmul.f32 1.0, %v1919
    %v1921 = vtanh.pop %v1907
    %v1922 = vxor.u32 %v1908, 2147483648
    %v1923 = vmul.f32 %v1922, 1.442695
    %v1924 = vpow.pop %v1923
    %v1925 = vadd.f32 %v1924, 1.0
    %v1926 = vrcp.pop %v1925
    %v1927 = vmul.f32 1.0, %v1926
    %v1928 = vmul.f32 %v1920, %v1729
    %v1929 = vmul.f32 %v1914, %v1921
    %v1930 = vadd.f32 %v1928, %v1929
    %v1931 = vtanh.pop %v1930
    %v1932 = vmul.f32 %v1927, %v1931
    %s1933 = scalar_lea.vmem [#allocation2], 14
    %1934 = vst [vmem:[%s1933] sm:$0x3] %v1932
    %v1935 = vld [vmem:[#allocation2] sm:$0x3]
    %v1936 = vld [vmem:[#allocation2 + $0x2] sm:$0x3]
    %v1937 = vld [vmem:[#allocation2 + $0x4] sm:$0x3]
    %v1938 = vld [vmem:[#allocation2 + $0x6] sm:$0x3]
    %v1939 = vld [vmem:[#allocation2 + $0x8] sm:$0x3]
    %v1940 = vld [vmem:[#allocation2 + $0xa] sm:$0x3]
    %v1941 = vld [vmem:[#allocation2 + $0xc] sm:$0x3]
    %v1942 = vld [vmem:[#allocation2 + $0xe] sm:$0x3]
    %v1943 = vld [vmem:[%s6] sm:$0x1]
    %v1945 = vlaneseq
    %v1946 = vshrl.u32 %v1945, 7
    %v1947 = vsub.s32 0, %v1946
    %v1948 = vrot.slane %v1943, %v1947
    %v1950 = vmul.f32 %v1935, %v1948
    %v1951 = vmul.f32 %v1936, %v1948
    %v1952 = vmul.f32 %v1937, %v1948
    %v1953 = vmul.f32 %v1938, %v1948
    %v1954 = vmul.f32 %v1939, %v1948
    %v1955 = vmul.f32 %v1940, %v1948
    %v1956 = vmul.f32 %v1941, %v1948
    %v1957 = vmul.f32 %v1942, %v1948
    %vm1958 = vcmask 1041408
    %v1959 = vsel %vm1958, %v1950, 0.0
    %1960 = vadd.xlane.f32.xlu0 %v1959
    %v1961 = vpop.xlane.xlu0 %1960
    %v1962 = vsel %vm1958, %v1951, 0.0
    %1963 = vadd.xlane.f32.xlu0 %v1962
    %v1964 = vpop.xlane.xlu0 %1963
    %v1965 = vsel %vm1958, %v1952, 0.0
    %1966 = vadd.xlane.f32.xlu0 %v1965
    %v1967 = vpop.xlane.xlu0 %1966
    %v1968 = vsel %vm1958, %v1953, 0.0
    %1969 = vadd.xlane.f32.xlu0 %v1968
    %v1970 = vpop.xlane.xlu0 %1969
    %v1971 = vsel %vm1958, %v1954, 0.0
    %1972 = vadd.xlane.f32.xlu0 %v1971
    %v1973 = vpop.xlane.xlu0 %1972
    %v1974 = vsel %vm1958, %v1955, 0.0
    %1975 = vadd.xlane.f32.xlu0 %v1974
    %v1976 = vpop.xlane.xlu0 %1975
    %v1977 = vsel %vm1958, %v1956, 0.0
    %1978 = vadd.xlane.f32.xlu0 %v1977
    %v1979 = vpop.xlane.xlu0 %1978
    %v1980 = vsel %vm1958, %v1957, 0.0
    %1981 = vadd.xlane.f32.xlu0 %v1980
    %v1982 = vpop.xlane.xlu0 %1981
    %s1983 = sld [smem:[#allocation3]]
    %v1984 = vstv %s1983
    %v1985 = vadd.f32 %v1961, %v1984
    %v1986 = vadd.f32 %v1964, %v1984
    %v1987 = vadd.f32 %v1967, %v1984
    %v1988 = vadd.f32 %v1970, %v1984
    %v1989 = vadd.f32 %v1973, %v1984
    %v1990 = vadd.f32 %v1976, %v1984
    %v1991 = vadd.f32 %v1979, %v1984
    %v1992 = vadd.f32 %v1982, %v1984
    %v1993 = vxor.u32 %v1985, 2147483648
    %v1994 = vxor.u32 %v1986, 2147483648
    %v1995 = vxor.u32 %v1987, 2147483648
    %v1996 = vxor.u32 %v1988, 2147483648
    %v1997 = vxor.u32 %v1989, 2147483648
    %v1998 = vxor.u32 %v1990, 2147483648
    %v1999 = vxor.u32 %v1991, 2147483648
    %v2000 = vxor.u32 %v1992, 2147483648
    %v2001 = vmul.f32 %v1993, 1.442695
    %v2002 = vpow.pop %v2001
    %v2003 = vmul.f32 %v1994, 1.442695
    %v2004 = vpow.pop %v2003
    %v2005 = vmul.f32 %v1995, 1.442695
    %v2006 = vpow.pop %v2005
    %v2007 = vmul.f32 %v1996, 1.442695
    %v2008 = vpow.pop %v2007
    %v2009 = vmul.f32 %v1997, 1.442695
    %v2010 = vpow.pop %v2009
    %v2011 = vmul.f32 %v1998, 1.442695
    %v2012 = vpow.pop %v2011
    %v2013 = vmul.f32 %v1999, 1.442695
    %v2014 = vpow.pop %v2013
    %v2015 = vmul.f32 %v2000, 1.442695
    %v2016 = vpow.pop %v2015
    %v2017 = vadd.f32 %v2002, 1.0
    %v2018 = vadd.f32 %v2004, 1.0
    %v2019 = vadd.f32 %v2006, 1.0
    %v2020 = vadd.f32 %v2008, 1.0
    %v2021 = vadd.f32 %v2010, 1.0
    %v2022 = vadd.f32 %v2012, 1.0
    %v2023 = vadd.f32 %v2014, 1.0
    %v2024 = vadd.f32 %v2016, 1.0
    %v2025 = vrcp.pop %v2017
    %v2026 = vmul.f32 1.0, %v2025
    %v2027 = vrcp.pop %v2018
    %v2028 = vmul.f32 1.0, %v2027
    %v2029 = vrcp.pop %v2019
    %v2030 = vmul.f32 1.0, %v2029
    %v2031 = vrcp.pop %v2020
    %v2032 = vmul.f32 1.0, %v2031
    %v2033 = vrcp.pop %v2021
    %v2034 = vmul.f32 1.0, %v2033
    %v2035 = vrcp.pop %v2022
    %v2036 = vmul.f32 1.0, %v2035
    %v2037 = vrcp.pop %v2023
    %v2038 = vmul.f32 1.0, %v2037
    %v2039 = vrcp.pop %v2024
    %v2040 = vmul.f32 1.0, %v2039
    %v2049 = vlaneseq
    %v2050 = vand.u32 %v2049, 127
    %v2051 = vlaneseq
    %v2052 = vshrl.u32 %v2051, 7
    %v2053 = vsub.s32 %v2050, %v2052
    %v2054 = vrot.slane %v2026, %v2053
    %v2055 = vlaneseq
    %v2056 = vshrl.u32 %v2055, 7
    %v2057 = vsub.s32 %v2050, %v2056
    %v2058 = vrot.slane %v2028, %v2057
    %v2059 = vlaneseq
    %v2060 = vshrl.u32 %v2059, 7
    %v2061 = vsub.s32 %v2050, %v2060
    %v2062 = vrot.slane %v2030, %v2061
    %v2063 = vlaneseq
    %v2064 = vshrl.u32 %v2063, 7
    %v2065 = vsub.s32 %v2050, %v2064
    %v2066 = vrot.slane %v2032, %v2065
    %v2067 = vlaneseq
    %v2068 = vshrl.u32 %v2067, 7
    %v2069 = vsub.s32 %v2050, %v2068
    %v2070 = vrot.slane %v2034, %v2069
    %v2071 = vlaneseq
    %v2072 = vshrl.u32 %v2071, 7
    %v2073 = vsub.s32 %v2050, %v2072
    %v2074 = vrot.slane %v2036, %v2073
    %v2075 = vlaneseq
    %v2076 = vshrl.u32 %v2075, 7
    %v2077 = vsub.s32 %v2050, %v2076
    %v2078 = vrot.slane %v2038, %v2077
    %v2079 = vlaneseq
    %v2080 = vshrl.u32 %v2079, 7
    %v2081 = vsub.s32 %v2050, %v2080
    %v2082 = vrot.slane %v2040, %v2081
    %vm2083 = vcmask 1041409
    %v2084 = vsel %vm2083, %v2058, %v2054
    %vm2085 = vcmask 1042434
    %v2086 = vsel %vm2085, %v2062, %v2084
    %vm2087 = vcmask 1043459
    %v2088 = vsel %vm2087, %v2066, %v2086
    %vm2089 = vcmask 1044484
    %v2090 = vsel %vm2089, %v2070, %v2088
    %vm2091 = vcmask 1045509
    %v2092 = vsel %vm2091, %v2074, %v2090
    %vm2093 = vcmask 1046534
    %v2094 = vsel %vm2093, %v2078, %v2092
    %vm2095 = vcmask 1047559
    %v2096 = vsel %vm2095, %v2082, %v2094
    %vm2098 = vcmask 15360
    %2099 = vst.msk [vmem:[%s8] sm:$0xff] %vm2098, %v2096
    %2100 = vst [vmem:[%s9] sm:$0x3] %v1932
    %2101 = vst [vmem:[#allocation12] sm:$0x3] %v1930
    // Predicated region
    $region50: #{_rnn_gate_steps.1} parent=1 // pred_check
      _
    $region51: #{_rnn_gate_steps.1} parent=1 // pred_check_branch
      %2103 = sbr.rel (0) target = $region53
    $region52: #{_rnn_gate_steps.1} parent=1 // pred_region
      _
    $region53: #{_rnn_gate_steps.1} parent=1 // pred_fallthru
      _
    // Predicated region
    $region54: #{_rnn_gate_steps.1} parent=1 // pred_check
      _
    $region55: #{_rnn_gate_steps.1} parent=1 // pred_check_branch
      %2105 = sbr.rel (0) target = $region57
    $region56: #{_rnn_gate_steps.1} parent=1 // pred_region
      _
    $region57: #{_rnn_gate_steps.1} parent=1 // pred_fallthru
      _
    // Predicated region
    $region58: #{_rnn_gate_steps.1} parent=1 // pred_check
      _
    $region59: #{_rnn_gate_steps.1} parent=1 // pred_check_branch
      %2107 = sbr.rel (0) target = $region61
    $region60: #{_rnn_gate_steps.1} parent=1 // pred_region
      %s2109 = ssub.s32 32, 32
      %2110 = vsyncadd [#allocation6], %s2109
      %s2112 = sshll.u32 [#allocation12], 4
      %s2113 = int_to_ptr.vmem [resolvable:$true] %s2112
      %2115 = dma.vmem_to_hbm [thread:$0]  %s2113, 32, %s10, [#allocation6]
    $region61: #{_rnn_gate_steps.1} parent=1 // pred_fallthru
      _
    // Predicated region
    $region62: #{_rnn_gate_steps.1} parent=1 // pred_check
      _
    $region63: #{_rnn_gate_steps.1} parent=1 // pred_check_branch
      %2117 = sbr.rel (0) target = $region65
    $region64: #{_rnn_gate_steps.1} parent=1 // pred_region
      _
    $region65: #{_rnn_gate_steps.1} parent=1 // pred_fallthru
      _
    // Predicated region
    $region66: #{_rnn_gate_steps.1} parent=1 // pred_check
      _
    $region67: #{_rnn_gate_steps.1} parent=1 // pred_check_branch
      %2119 = sbr.rel (0) target = $region69
    $region68: #{_rnn_gate_steps.1} parent=1 // pred_region
      _
    $region69: #{_rnn_gate_steps.1} parent=1 // pred_fallthru
      _
    // Predicated region
    $region70: #{_rnn_gate_steps.1} parent=1 // pred_check
      _
    $region71: #{_rnn_gate_steps.1} parent=1 // pred_check_branch
      %2121 = sbr.rel (0) target = $region73
    $region72: #{_rnn_gate_steps.1} parent=1 // pred_region
      %2122 = dma.done [#allocation6], 32
    $region73: #{_rnn_gate_steps.1} parent=1 // pred_fallthru
      _
    %2123 = vsyncpa [#allocation5], 1
    %2124 = vsyncpa [#allocation8], 1
    %2125 = vsyncpa [#allocation11], 1
    %2126 = vsyncpa [#allocation6], 1

</llo_original>
